<compile_context>
chip_gen: v7x
topology: tpu7x:2x2x1
jax: 0.10.0
libtpu: 0.0.40
codegen_flags: <defaults>
</compile_context>

<pallas_src>
import functools

import jax
import jax.numpy as jnp
from jax.experimental import pallas as pl
from jax.experimental.pallas import tpu as pltpu


def _round_up(x, m):
    return ((x + m - 1) // m) * m


# ------------------------- fused CNN_LSTM kernel --------------------------- #
def _cnn_lstm_kernel(x_ref, wconv_ref, wlstm_ref, wfc_ref, bias_ref,
                     out_ref, h1_all_ref, *, T, B, C, H, NC):
    # x_ref     : ((T+2)*B, D) f32  time-major; one zero time-block of B rows on
    #                               each side (conv padding=1), batch padded to B.
    # wconv_ref : (3, D, C)    bf16 conv taps (tap k applies to x_{t+k-1}).
    # wlstm_ref : (C+3H, 4H)   bf16 rows = [W_ih1; W_hh1; W_ih2; W_hh2].
    # wfc_ref   : (H, NC)      bf16
    # bias_ref  : (4, Wb)      f32  rows = [b_conv | b1 | b2 | b_fc] (zero-padded).
    # out_ref   : (B, NC)      f32
    # h1_all_ref: (T*B, H)     f32  scratch for the layer-1 hidden states.
    f32 = jnp.float32
    bf16 = jnp.bfloat16
    TB = T * B

    # ---- biases (each used exactly once, outside the recurrent loops) ----
    b_conv = bias_ref[0:1, 0:C]
    b1 = bias_ref[1:2, 0:4 * H]
    b2 = bias_ref[2:3, 0:4 * H]
    b_fc = bias_ref[3:4, 0:NC]

    # ---- Conv1d(k=3, padding=1) + ReLU over all (t, b) rows ----
    # Three tile-aligned static sublane slices (B multiple of 8) of the
    # time-padded input give the three taps: 3 independent MXU pushes, summed.
    x_prev = x_ref[0:TB, :].astype(bf16)           # x_{t-1}
    x_mid = x_ref[B:B + TB, :].astype(bf16)        # x_t
    x_next = x_ref[2 * B:2 * B + TB, :].astype(bf16)  # x_{t+1}
    conv = (jnp.dot(x_prev, wconv_ref[0], preferred_element_type=f32)
            + jnp.dot(x_mid, wconv_ref[1], preferred_element_type=f32)
            + jnp.dot(x_next, wconv_ref[2], preferred_element_type=f32)
            + b_conv)
    conv = jnp.maximum(conv, 0.0)                                  # (TB, C) f32

    # ---- LSTM weights (bf16 matmul operands, sliced once) ----
    w_ih1 = wlstm_ref[0:C, :]
    w_hh1 = wlstm_ref[C:C + H, :]
    w_ih2 = wlstm_ref[C + H:C + 2 * H, :]
    w_hh2 = wlstm_ref[C + 2 * H:C + 3 * H, :]

    def apply_gates(gates, c):
        # PyTorch gate order i, f, g, o.  Full-width EUP (sigmoid/tanh over the
        # whole (B, 4H) slab), then lane slices feed the VPU combine.
        sig = jax.nn.sigmoid(gates)
        th = jnp.tanh(gates)
        i_g = sig[:, 0:H]
        f_g = sig[:, H:2 * H]
        g_g = th[:, 2 * H:3 * H]
        o_g = sig[:, 3 * H:4 * H]
        c_new = f_g * c + i_g * g_g
        h_new = o_g * jnp.tanh(c_new)
        return h_new, c_new

    zero = jnp.zeros((B, H), f32)

    # ---- layer 1: input projection hoisted to ONE (TB,C)x(C,4H) matmul ----
    g1_all = (jnp.dot(conv.astype(bf16), w_ih1, preferred_element_type=f32)
              + b1)                                                # (TB, 4H)

    # Recurrence: only h1 @ W_hh1 (+ gates) sits on the serial chain.
    h1, c1 = zero, zero
    for t in range(T):
        g1 = g1_all[t * B:(t + 1) * B, :] + jnp.dot(
            h1.astype(bf16), w_hh1, preferred_element_type=f32)
        h1, c1 = apply_gates(g1, c1)
        h1_all_ref[t * B:(t + 1) * B, :] = h1

    # ---- layer 2: input projection hoisted to ONE (TB,H)x(H,4H) matmul ----
    g2_all = (jnp.dot(h1_all_ref[...].astype(bf16), w_ih2,
                      preferred_element_type=f32) + b2)            # (TB, 4H)

    h2, c2 = zero, zero
    for t in range(T):
        g2 = g2_all[t * B:(t + 1) * B, :] + jnp.dot(
            h2.astype(bf16), w_hh2, preferred_element_type=f32)
        h2, c2 = apply_gates(g2, c2)

    # ---- fc(h[-1]) : final hidden state of the top LSTM layer ----
    out_ref[...] = (jnp.dot(h2.astype(bf16), wfc_ref[...],
                            preferred_element_type=f32) + b_fc)


# ----------------------- one-time parameter packing ------------------------ #
def pack_cnn_lstm_params(w_conv, b_conv, wih1, whh1, b1, wih2, whh2, b2,
                         wfc, bfc):
    """Init-time packing of parameters into the kernel's 4 weight/bias operands."""
    C, D, K = w_conv.shape
    assert K == 3
    H = whh1.shape[0]
    NC = wfc.shape[1]

    w_conv_taps = jnp.transpose(w_conv, (2, 1, 0)).astype(jnp.bfloat16)  # (3,D,C)
    w_lstm = jnp.concatenate([wih1, whh1, wih2, whh2],
                             axis=0).astype(jnp.bfloat16)                # (C+3H,4H)
    w_fc = wfc.astype(jnp.bfloat16)                                      # (H,NC)

    wb = max(C, 4 * H, NC)

    def _row(v):
        v = jnp.reshape(v, (-1,)).astype(jnp.float32)
        return jnp.pad(v, (0, wb - v.shape[0]))

    biases = jnp.stack([_row(b_conv), _row(b1), _row(b2), _row(bfc)],
                       axis=0)                                           # (4, wb)
    return dict(w_conv=w_conv_taps, w_lstm=w_lstm, w_fc=w_fc, biases=biases)


# --------------------------------- forward --------------------------------- #
@jax.jit
def cnn_lstm_forward(x, packed):
    # x: (B, T, D) batch-first input (same as the PyTorch module).
    B, T, D = x.shape
    C = packed["w_conv"].shape[2]
    H = packed["w_lstm"].shape[1] // 4
    NC = packed["w_fc"].shape[1]
    B_pad = _round_up(max(B, 8), 8)   # one sublane tile -> tile-aligned steps

    # Minimal per-forward prep (one tiny fused XLA op): time-major layout,
    # batch zero-padded to B_pad, one zero time-block on each side (padding=1).
    x_tm = jnp.transpose(x, (1, 0, 2)).astype(jnp.float32)         # (T, B, D)
    x_tm = jnp.pad(x_tm, ((1, 1), (0, B_pad - B), (0, 0)))         # (T+2, B_pad, D)
    x_flat = x_tm.reshape((T + 2) * B_pad, D)

    kernel = functools.partial(_cnn_lstm_kernel, T=T, B=B_pad, C=C, H=H, NC=NC)
    vmem = pl.BlockSpec(memory_space=pltpu.MemorySpace.VMEM)
    out = pl.pallas_call(
        kernel,
        out_shape=jax.ShapeDtypeStruct((B_pad, NC), jnp.float32),
        in_specs=[vmem] * 5,
        out_specs=vmem,
        scratch_shapes=[pltpu.VMEM((T * B_pad, H), jnp.float32)],
    )(x_flat, packed["w_conv"], packed["w_lstm"], packed["w_fc"],
      packed["biases"])
    return out[:B]


if __name__ == "__main__":
    # Small shapes consistent with the module's forward.
    B, T, D = 2, 8, 4        # batch, seq_len, input_dim
    C, H, NC = 16, 32, 5     # cnn_channels, lstm_hidden, num_classes

    key = jax.random.PRNGKey(0)
    keys = jax.random.split(key, 12)

    def u(k, shape):
        return jax.random.uniform(k, shape, jnp.float32, minval=-0.1, maxval=0.1)

    x = jax.random.normal(keys[0], (B, T, D), jnp.float32)

    # Conv1d(input_dim -> cnn_channels, kernel_size=3, padding=1), PyTorch layout.
    w_conv = u(keys[1], (C, D, 3))
    b_conv = u(keys[2], (C,))

    # 2-layer LSTM (weights pre-transposed for x @ W, biases pre-summed
    # b_ih + b_hh) + Linear(H -> NC).
    wih1 = u(keys[3], (C, 4 * H))
    whh1 = u(keys[4], (H, 4 * H))
    b1 = u(keys[5], (4 * H,))
    wih2 = u(keys[6], (H, 4 * H))
    whh2 = u(keys[7], (H, 4 * H))
    b2 = u(keys[8], (4 * H,))
    wfc = u(keys[9], (H, NC))
    bfc = u(keys[10], (NC,))

    packed = pack_cnn_lstm_params(w_conv, b_conv, wih1, whh1, b1,
                                  wih2, whh2, b2, wfc, bfc)

    out = cnn_lstm_forward(x, packed)
    jax.block_until_ready(out)
    assert out.shape == (B, NC) and out.dtype == jnp.float32
    assert bool(jnp.all(jnp.isfinite(out)))
    print("KERNEL_OK")
</pallas_src>

<mosaic_0001>
module attributes {stable_mosaic.version = 11 : i64} {
  func.func @_cnn_lstm_kernel(%arg0: memref<80x4xf32, #tpu.memory_space<vmem>>, %arg1: memref<3x4x16xbf16, #tpu.memory_space<vmem>>, %arg2: memref<112x128xbf16, #tpu.memory_space<vmem>>, %arg3: memref<32x5xbf16, #tpu.memory_space<vmem>>, %arg4: memref<4x128xf32, #tpu.memory_space<vmem>>, %arg5: memref<8x5xf32, #tpu.memory_space<vmem>>, %arg6: memref<64x32xf32, #tpu.memory_space<vmem>>) attributes {dimension_semantics = [], scalar_prefetch = 0 : i64, scratch_operands = 1 : i64, tpu.core_type = #tpu.core_type<tc>} {
    %c0 = arith.constant 0 : index
    %c0_0 = arith.constant 0 : index
    %0 = vector.load %arg4[%c0, %c0_0] : memref<4x128xf32, #tpu.memory_space<vmem>>, vector<1x16xf32>
    %c1 = arith.constant 1 : index
    %c0_1 = arith.constant 0 : index
    %1 = vector.load %arg4[%c1, %c0_1] : memref<4x128xf32, #tpu.memory_space<vmem>>, vector<1x128xf32>
    %c2 = arith.constant 2 : index
    %c0_2 = arith.constant 0 : index
    %2 = vector.load %arg4[%c2, %c0_2] : memref<4x128xf32, #tpu.memory_space<vmem>>, vector<1x128xf32>
    %c3 = arith.constant 3 : index
    %c0_3 = arith.constant 0 : index
    %3 = vector.load %arg4[%c3, %c0_3] : memref<4x128xf32, #tpu.memory_space<vmem>>, vector<1x5xf32>
    %c0_4 = arith.constant 0 : index
    %c0_5 = arith.constant 0 : index
    %4 = vector.load %arg0[%c0_4, %c0_5] : memref<80x4xf32, #tpu.memory_space<vmem>>, vector<64x4xf32>
    %5 = arith.truncf %4 : vector<64x4xf32> to vector<64x4xbf16>
    %c8 = arith.constant 8 : index
    %c0_6 = arith.constant 0 : index
    %6 = vector.load %arg0[%c8, %c0_6] : memref<80x4xf32, #tpu.memory_space<vmem>>, vector<64x4xf32>
    %7 = arith.truncf %6 : vector<64x4xf32> to vector<64x4xbf16>
    %c16 = arith.constant 16 : index
    %c0_7 = arith.constant 0 : index
    %8 = vector.load %arg0[%c16, %c0_7] : memref<80x4xf32, #tpu.memory_space<vmem>>, vector<64x4xf32>
    %9 = arith.truncf %8 : vector<64x4xf32> to vector<64x4xbf16>
    %c0_8 = arith.constant 0 : index
    %c0_9 = arith.constant 0 : index
    %c0_10 = arith.constant 0 : index
    %10 = vector.load %arg1[%c0_8, %c0_9, %c0_10] : memref<3x4x16xbf16, #tpu.memory_space<vmem>>, vector<1x4x16xbf16>
    %11 = vector.shape_cast %10 : vector<1x4x16xbf16> to vector<4x16xbf16>
    %cst = arith.constant dense<0.000000e+00> : vector<64x16xf32>
    %12 = tpu.matmul %5, %11, %cst {dimension_numbers = #tpu.dot_dimension_numbers<[1], [0], [0], [1], [0, 0, 1, 1], [], []>} : vector<64x4xbf16>, vector<4x16xbf16>, vector<64x16xf32> -> vector<64x16xf32>
    %c1_11 = arith.constant 1 : index
    %c0_12 = arith.constant 0 : index
    %c0_13 = arith.constant 0 : index
    %13 = vector.load %arg1[%c1_11, %c0_12, %c0_13] : memref<3x4x16xbf16, #tpu.memory_space<vmem>>, vector<1x4x16xbf16>
    %14 = vector.shape_cast %13 : vector<1x4x16xbf16> to vector<4x16xbf16>
    %cst_14 = arith.constant dense<0.000000e+00> : vector<64x16xf32>
    %15 = tpu.matmul %7, %14, %cst_14 {dimension_numbers = #tpu.dot_dimension_numbers<[1], [0], [0], [1], [0, 0, 1, 1], [], []>} : vector<64x4xbf16>, vector<4x16xbf16>, vector<64x16xf32> -> vector<64x16xf32>
    %16 = arith.addf %12, %15 : vector<64x16xf32>
    %c2_15 = arith.constant 2 : index
    %c0_16 = arith.constant 0 : index
    %c0_17 = arith.constant 0 : index
    %17 = vector.load %arg1[%c2_15, %c0_16, %c0_17] : memref<3x4x16xbf16, #tpu.memory_space<vmem>>, vector<1x4x16xbf16>
    %18 = vector.shape_cast %17 : vector<1x4x16xbf16> to vector<4x16xbf16>
    %cst_18 = arith.constant dense<0.000000e+00> : vector<64x16xf32>
    %19 = tpu.matmul %9, %18, %cst_18 {dimension_numbers = #tpu.dot_dimension_numbers<[1], [0], [0], [1], [0, 0, 1, 1], [], []>} : vector<64x4xbf16>, vector<4x16xbf16>, vector<64x16xf32> -> vector<64x16xf32>
    %20 = arith.addf %16, %19 : vector<64x16xf32>
    %21 = vector.broadcast %0 : vector<1x16xf32> to vector<64x16xf32>
    %22 = arith.addf %20, %21 : vector<64x16xf32>
    %cst_19 = arith.constant 0.000000e+00 : f32
    %23 = vector.broadcast %cst_19 : f32 to vector<64x16xf32>
    %24 = arith.maximumf %22, %23 : vector<64x16xf32>
    %c0_20 = arith.constant 0 : index
    %c0_21 = arith.constant 0 : index
    %25 = vector.load %arg2[%c0_20, %c0_21] : memref<112x128xbf16, #tpu.memory_space<vmem>>, vector<16x128xbf16>
    %c16_22 = arith.constant 16 : index
    %c0_23 = arith.constant 0 : index
    %26 = vector.load %arg2[%c16_22, %c0_23] : memref<112x128xbf16, #tpu.memory_space<vmem>>, vector<32x128xbf16>
    %c48 = arith.constant 48 : index
    %c0_24 = arith.constant 0 : index
    %27 = vector.load %arg2[%c48, %c0_24] : memref<112x128xbf16, #tpu.memory_space<vmem>>, vector<32x128xbf16>
    %c80 = arith.constant 80 : index
    %c0_25 = arith.constant 0 : index
    %28 = vector.load %arg2[%c80, %c0_25] : memref<112x128xbf16, #tpu.memory_space<vmem>>, vector<32x128xbf16>
    %cst_26 = arith.constant 0.000000e+00 : f32
    %29 = vector.broadcast %cst_26 : f32 to vector<8x32xf32>
    %30 = arith.truncf %24 : vector<64x16xf32> to vector<64x16xbf16>
    %cst_27 = arith.constant dense<0.000000e+00> : vector<64x128xf32>
    %31 = tpu.matmul %30, %25, %cst_27 {dimension_numbers = #tpu.dot_dimension_numbers<[1], [0], [0], [1], [0, 0, 1, 1], [], []>} : vector<64x16xbf16>, vector<16x128xbf16>, vector<64x128xf32> -> vector<64x128xf32>
    %32 = vector.broadcast %1 : vector<1x128xf32> to vector<64x128xf32>
    %33 = arith.addf %31, %32 : vector<64x128xf32>
    %34 = vector.extract_strided_slice %33 {offsets = [0, 0], sizes = [8, 128], strides = [1, 1]} : vector<64x128xf32> to vector<8x128xf32>
    %35 = arith.truncf %29 : vector<8x32xf32> to vector<8x32xbf16>
    %cst_28 = arith.constant dense<0.000000e+00> : vector<8x128xf32>
    %36 = tpu.matmul %35, %26, %cst_28 {dimension_numbers = #tpu.dot_dimension_numbers<[1], [0], [0], [1], [0, 0, 1, 1], [], []>} : vector<8x32xbf16>, vector<32x128xbf16>, vector<8x128xf32> -> vector<8x128xf32>
    %37 = arith.addf %34, %36 : vector<8x128xf32>
    %38 = arith.negf %37 : vector<8x128xf32>
    %39 = math.exp %38 : vector<8x128xf32>
    %cst_29 = arith.constant 1.000000e+00 : f32
    %40 = vector.broadcast %cst_29 : f32 to vector<8x128xf32>
    %41 = arith.addf %40, %39 : vector<8x128xf32>
    %42 = arith.divf %40, %41 : vector<8x128xf32>
    %43 = math.tanh %37 : vector<8x128xf32>
    %44 = vector.extract_strided_slice %42 {offsets = [0, 0], sizes = [8, 32], strides = [1, 1]} : vector<8x128xf32> to vector<8x32xf32>
    %45 = vector.extract_strided_slice %42 {offsets = [0, 32], sizes = [8, 32], strides = [1, 1]} : vector<8x128xf32> to vector<8x32xf32>
    %46 = vector.extract_strided_slice %43 {offsets = [0, 64], sizes = [8, 32], strides = [1, 1]} : vector<8x128xf32> to vector<8x32xf32>
    %47 = vector.extract_strided_slice %42 {offsets = [0, 96], sizes = [8, 32], strides = [1, 1]} : vector<8x128xf32> to vector<8x32xf32>
    %48 = arith.mulf %45, %29 : vector<8x32xf32>
    %49 = arith.mulf %44, %46 : vector<8x32xf32>
    %50 = arith.addf %48, %49 : vector<8x32xf32>
    %51 = math.tanh %50 : vector<8x32xf32>
    %52 = arith.mulf %47, %51 : vector<8x32xf32>
    %c0_30 = arith.constant 0 : index
    %c0_31 = arith.constant 0 : index
    %53 = vector.load %arg6[%c0_30, %c0_31] : memref<64x32xf32, #tpu.memory_space<vmem>>, vector<8x32xf32>
    tpu.vector_store %arg6[%c0_30, %c0_31], %52 {strides = array<i32>} : memref<64x32xf32, #tpu.memory_space<vmem>>, vector<8x32xf32>,
    %54 = vector.extract_strided_slice %33 {offsets = [8, 0], sizes = [8, 128], strides = [1, 1]} : vector<64x128xf32> to vector<8x128xf32>
    %55 = arith.truncf %52 : vector<8x32xf32> to vector<8x32xbf16>
    %cst_32 = arith.constant dense<0.000000e+00> : vector<8x128xf32>
    %56 = tpu.matmul %55, %26, %cst_32 {dimension_numbers = #tpu.dot_dimension_numbers<[1], [0], [0], [1], [0, 0, 1, 1], [], []>} : vector<8x32xbf16>, vector<32x128xbf16>, vector<8x128xf32> -> vector<8x128xf32>
    %57 = arith.addf %54, %56 : vector<8x128xf32>
    %58 = arith.negf %57 : vector<8x128xf32>
    %59 = math.exp %58 : vector<8x128xf32>
    %cst_33 = arith.constant 1.000000e+00 : f32
    %60 = vector.broadcast %cst_33 : f32 to vector<8x128xf32>
    %61 = arith.addf %60, %59 : vector<8x128xf32>
    %62 = arith.divf %60, %61 : vector<8x128xf32>
    %63 = math.tanh %57 : vector<8x128xf32>
    %64 = vector.extract_strided_slice %62 {offsets = [0, 0], sizes = [8, 32], strides = [1, 1]} : vector<8x128xf32> to vector<8x32xf32>
    %65 = vector.extract_strided_slice %62 {offsets = [0, 32], sizes = [8, 32], strides = [1, 1]} : vector<8x128xf32> to vector<8x32xf32>
    %66 = vector.extract_strided_slice %63 {offsets = [0, 64], sizes = [8, 32], strides = [1, 1]} : vector<8x128xf32> to vector<8x32xf32>
    %67 = vector.extract_strided_slice %62 {offsets = [0, 96], sizes = [8, 32], strides = [1, 1]} : vector<8x128xf32> to vector<8x32xf32>
    %68 = arith.mulf %65, %50 : vector<8x32xf32>
    %69 = arith.mulf %64, %66 : vector<8x32xf32>
    %70 = arith.addf %68, %69 : vector<8x32xf32>
    %71 = math.tanh %70 : vector<8x32xf32>
    %72 = arith.mulf %67, %71 : vector<8x32xf32>
    %c8_34 = arith.constant 8 : index
    %c0_35 = arith.constant 0 : index
    %73 = vector.load %arg6[%c8_34, %c0_35] : memref<64x32xf32, #tpu.memory_space<vmem>>, vector<8x32xf32>
    tpu.vector_store %arg6[%c8_34, %c0_35], %72 {strides = array<i32>} : memref<64x32xf32, #tpu.memory_space<vmem>>, vector<8x32xf32>,
    %74 = vector.extract_strided_slice %33 {offsets = [16, 0], sizes = [8, 128], strides = [1, 1]} : vector<64x128xf32> to vector<8x128xf32>
    %75 = arith.truncf %72 : vector<8x32xf32> to vector<8x32xbf16>
    %cst_36 = arith.constant dense<0.000000e+00> : vector<8x128xf32>
    %76 = tpu.matmul %75, %26, %cst_36 {dimension_numbers = #tpu.dot_dimension_numbers<[1], [0], [0], [1], [0, 0, 1, 1], [], []>} : vector<8x32xbf16>, vector<32x128xbf16>, vector<8x128xf32> -> vector<8x128xf32>
    %77 = arith.addf %74, %76 : vector<8x128xf32>
    %78 = arith.negf %77 : vector<8x128xf32>
    %79 = math.exp %78 : vector<8x128xf32>
    %cst_37 = arith.constant 1.000000e+00 : f32
    %80 = vector.broadcast %cst_37 : f32 to vector<8x128xf32>
    %81 = arith.addf %80, %79 : vector<8x128xf32>
    %82 = arith.divf %80, %81 : vector<8x128xf32>
    %83 = math.tanh %77 : vector<8x128xf32>
    %84 = vector.extract_strided_slice %82 {offsets = [0, 0], sizes = [8, 32], strides = [1, 1]} : vector<8x128xf32> to vector<8x32xf32>
    %85 = vector.extract_strided_slice %82 {offsets = [0, 32], sizes = [8, 32], strides = [1, 1]} : vector<8x128xf32> to vector<8x32xf32>
    %86 = vector.extract_strided_slice %83 {offsets = [0, 64], sizes = [8, 32], strides = [1, 1]} : vector<8x128xf32> to vector<8x32xf32>
    %87 = vector.extract_strided_slice %82 {offsets = [0, 96], sizes = [8, 32], strides = [1, 1]} : vector<8x128xf32> to vector<8x32xf32>
    %88 = arith.mulf %85, %70 : vector<8x32xf32>
    %89 = arith.mulf %84, %86 : vector<8x32xf32>
    %90 = arith.addf %88, %89 : vector<8x32xf32>
    %91 = math.tanh %90 : vector<8x32xf32>
    %92 = arith.mulf %87, %91 : vector<8x32xf32>
    %c16_38 = arith.constant 16 : index
    %c0_39 = arith.constant 0 : index
    %93 = vector.load %arg6[%c16_38, %c0_39] : memref<64x32xf32, #tpu.memory_space<vmem>>, vector<8x32xf32>
    tpu.vector_store %arg6[%c16_38, %c0_39], %92 {strides = array<i32>} : memref<64x32xf32, #tpu.memory_space<vmem>>, vector<8x32xf32>,
    %94 = vector.extract_strided_slice %33 {offsets = [24, 0], sizes = [8, 128], strides = [1, 1]} : vector<64x128xf32> to vector<8x128xf32>
    %95 = arith.truncf %92 : vector<8x32xf32> to vector<8x32xbf16>
    %cst_40 = arith.constant dense<0.000000e+00> : vector<8x128xf32>
    %96 = tpu.matmul %95, %26, %cst_40 {dimension_numbers = #tpu.dot_dimension_numbers<[1], [0], [0], [1], [0, 0, 1, 1], [], []>} : vector<8x32xbf16>, vector<32x128xbf16>, vector<8x128xf32> -> vector<8x128xf32>
    %97 = arith.addf %94, %96 : vector<8x128xf32>
    %98 = arith.negf %97 : vector<8x128xf32>
    %99 = math.exp %98 : vector<8x128xf32>
    %cst_41 = arith.constant 1.000000e+00 : f32
    %100 = vector.broadcast %cst_41 : f32 to vector<8x128xf32>
    %101 = arith.addf %100, %99 : vector<8x128xf32>
    %102 = arith.divf %100, %101 : vector<8x128xf32>
    %103 = math.tanh %97 : vector<8x128xf32>
    %104 = vector.extract_strided_slice %102 {offsets = [0, 0], sizes = [8, 32], strides = [1, 1]} : vector<8x128xf32> to vector<8x32xf32>
    %105 = vector.extract_strided_slice %102 {offsets = [0, 32], sizes = [8, 32], strides = [1, 1]} : vector<8x128xf32> to vector<8x32xf32>
    %106 = vector.extract_strided_slice %103 {offsets = [0, 64], sizes = [8, 32], strides = [1, 1]} : vector<8x128xf32> to vector<8x32xf32>
    %107 = vector.extract_strided_slice %102 {offsets = [0, 96], sizes = [8, 32], strides = [1, 1]} : vector<8x128xf32> to vector<8x32xf32>
    %108 = arith.mulf %105, %90 : vector<8x32xf32>
    %109 = arith.mulf %104, %106 : vector<8x32xf32>
    %110 = arith.addf %108, %109 : vector<8x32xf32>
    %111 = math.tanh %110 : vector<8x32xf32>
    %112 = arith.mulf %107, %111 : vector<8x32xf32>
    %c24 = arith.constant 24 : index
    %c0_42 = arith.constant 0 : index
    %113 = vector.load %arg6[%c24, %c0_42] : memref<64x32xf32, #tpu.memory_space<vmem>>, vector<8x32xf32>
    tpu.vector_store %arg6[%c24, %c0_42], %112 {strides = array<i32>} : memref<64x32xf32, #tpu.memory_space<vmem>>, vector<8x32xf32>,
    %114 = vector.extract_strided_slice %33 {offsets = [32, 0], sizes = [8, 128], strides = [1, 1]} : vector<64x128xf32> to vector<8x128xf32>
    %115 = arith.truncf %112 : vector<8x32xf32> to vector<8x32xbf16>
    %cst_43 = arith.constant dense<0.000000e+00> : vector<8x128xf32>
    %116 = tpu.matmul %115, %26, %cst_43 {dimension_numbers = #tpu.dot_dimension_numbers<[1], [0], [0], [1], [0, 0, 1, 1], [], []>} : vector<8x32xbf16>, vector<32x128xbf16>, vector<8x128xf32> -> vector<8x128xf32>
    %117 = arith.addf %114, %116 : vector<8x128xf32>
    %118 = arith.negf %117 : vector<8x128xf32>
    %119 = math.exp %118 : vector<8x128xf32>
    %cst_44 = arith.constant 1.000000e+00 : f32
    %120 = vector.broadcast %cst_44 : f32 to vector<8x128xf32>
    %121 = arith.addf %120, %119 : vector<8x128xf32>
    %122 = arith.divf %120, %121 : vector<8x128xf32>
    %123 = math.tanh %117 : vector<8x128xf32>
    %124 = vector.extract_strided_slice %122 {offsets = [0, 0], sizes = [8, 32], strides = [1, 1]} : vector<8x128xf32> to vector<8x32xf32>
    %125 = vector.extract_strided_slice %122 {offsets = [0, 32], sizes = [8, 32], strides = [1, 1]} : vector<8x128xf32> to vector<8x32xf32>
    %126 = vector.extract_strided_slice %123 {offsets = [0, 64], sizes = [8, 32], strides = [1, 1]} : vector<8x128xf32> to vector<8x32xf32>
    %127 = vector.extract_strided_slice %122 {offsets = [0, 96], sizes = [8, 32], strides = [1, 1]} : vector<8x128xf32> to vector<8x32xf32>
    %128 = arith.mulf %125, %110 : vector<8x32xf32>
    %129 = arith.mulf %124, %126 : vector<8x32xf32>
    %130 = arith.addf %128, %129 : vector<8x32xf32>
    %131 = math.tanh %130 : vector<8x32xf32>
    %132 = arith.mulf %127, %131 : vector<8x32xf32>
    %c32 = arith.constant 32 : index
    %c0_45 = arith.constant 0 : index
    %133 = vector.load %arg6[%c32, %c0_45] : memref<64x32xf32, #tpu.memory_space<vmem>>, vector<8x32xf32>
    tpu.vector_store %arg6[%c32, %c0_45], %132 {strides = array<i32>} : memref<64x32xf32, #tpu.memory_space<vmem>>, vector<8x32xf32>,
    %134 = vector.extract_strided_slice %33 {offsets = [40, 0], sizes = [8, 128], strides = [1, 1]} : vector<64x128xf32> to vector<8x128xf32>
    %135 = arith.truncf %132 : vector<8x32xf32> to vector<8x32xbf16>
    %cst_46 = arith.constant dense<0.000000e+00> : vector<8x128xf32>
    %136 = tpu.matmul %135, %26, %cst_46 {dimension_numbers = #tpu.dot_dimension_numbers<[1], [0], [0], [1], [0, 0, 1, 1], [], []>} : vector<8x32xbf16>, vector<32x128xbf16>, vector<8x128xf32> -> vector<8x128xf32>
    %137 = arith.addf %134, %136 : vector<8x128xf32>
    %138 = arith.negf %137 : vector<8x128xf32>
    %139 = math.exp %138 : vector<8x128xf32>
    %cst_47 = arith.constant 1.000000e+00 : f32
    %140 = vector.broadcast %cst_47 : f32 to vector<8x128xf32>
    %141 = arith.addf %140, %139 : vector<8x128xf32>
    %142 = arith.divf %140, %141 : vector<8x128xf32>
    %143 = math.tanh %137 : vector<8x128xf32>
    %144 = vector.extract_strided_slice %142 {offsets = [0, 0], sizes = [8, 32], strides = [1, 1]} : vector<8x128xf32> to vector<8x32xf32>
    %145 = vector.extract_strided_slice %142 {offsets = [0, 32], sizes = [8, 32], strides = [1, 1]} : vector<8x128xf32> to vector<8x32xf32>
    %146 = vector.extract_strided_slice %143 {offsets = [0, 64], sizes = [8, 32], strides = [1, 1]} : vector<8x128xf32> to vector<8x32xf32>
    %147 = vector.extract_strided_slice %142 {offsets = [0, 96], sizes = [8, 32], strides = [1, 1]} : vector<8x128xf32> to vector<8x32xf32>
    %148 = arith.mulf %145, %130 : vector<8x32xf32>
    %149 = arith.mulf %144, %146 : vector<8x32xf32>
    %150 = arith.addf %148, %149 : vector<8x32xf32>
    %151 = math.tanh %150 : vector<8x32xf32>
    %152 = arith.mulf %147, %151 : vector<8x32xf32>
    %c40 = arith.constant 40 : index
    %c0_48 = arith.constant 0 : index
    %153 = vector.load %arg6[%c40, %c0_48] : memref<64x32xf32, #tpu.memory_space<vmem>>, vector<8x32xf32>
    tpu.vector_store %arg6[%c40, %c0_48], %152 {strides = array<i32>} : memref<64x32xf32, #tpu.memory_space<vmem>>, vector<8x32xf32>,
    %154 = vector.extract_strided_slice %33 {offsets = [48, 0], sizes = [8, 128], strides = [1, 1]} : vector<64x128xf32> to vector<8x128xf32>
    %155 = arith.truncf %152 : vector<8x32xf32> to vector<8x32xbf16>
    %cst_49 = arith.constant dense<0.000000e+00> : vector<8x128xf32>
    %156 = tpu.matmul %155, %26, %cst_49 {dimension_numbers = #tpu.dot_dimension_numbers<[1], [0], [0], [1], [0, 0, 1, 1], [], []>} : vector<8x32xbf16>, vector<32x128xbf16>, vector<8x128xf32> -> vector<8x128xf32>
    %157 = arith.addf %154, %156 : vector<8x128xf32>
    %158 = arith.negf %157 : vector<8x128xf32>
    %159 = math.exp %158 : vector<8x128xf32>
    %cst_50 = arith.constant 1.000000e+00 : f32
    %160 = vector.broadcast %cst_50 : f32 to vector<8x128xf32>
    %161 = arith.addf %160, %159 : vector<8x128xf32>
    %162 = arith.divf %160, %161 : vector<8x128xf32>
    %163 = math.tanh %157 : vector<8x128xf32>
    %164 = vector.extract_strided_slice %162 {offsets = [0, 0], sizes = [8, 32], strides = [1, 1]} : vector<8x128xf32> to vector<8x32xf32>
    %165 = vector.extract_strided_slice %162 {offsets = [0, 32], sizes = [8, 32], strides = [1, 1]} : vector<8x128xf32> to vector<8x32xf32>
    %166 = vector.extract_strided_slice %163 {offsets = [0, 64], sizes = [8, 32], strides = [1, 1]} : vector<8x128xf32> to vector<8x32xf32>
    %167 = vector.extract_strided_slice %162 {offsets = [0, 96], sizes = [8, 32], strides = [1, 1]} : vector<8x128xf32> to vector<8x32xf32>
    %168 = arith.mulf %165, %150 : vector<8x32xf32>
    %169 = arith.mulf %164, %166 : vector<8x32xf32>
    %170 = arith.addf %168, %169 : vector<8x32xf32>
    %171 = math.tanh %170 : vector<8x32xf32>
    %172 = arith.mulf %167, %171 : vector<8x32xf32>
    %c48_51 = arith.constant 48 : index
    %c0_52 = arith.constant 0 : index
    %173 = vector.load %arg6[%c48_51, %c0_52] : memref<64x32xf32, #tpu.memory_space<vmem>>, vector<8x32xf32>
    tpu.vector_store %arg6[%c48_51, %c0_52], %172 {strides = array<i32>} : memref<64x32xf32, #tpu.memory_space<vmem>>, vector<8x32xf32>,
    %174 = vector.extract_strided_slice %33 {offsets = [56, 0], sizes = [8, 128], strides = [1, 1]} : vector<64x128xf32> to vector<8x128xf32>
    %175 = arith.truncf %172 : vector<8x32xf32> to vector<8x32xbf16>
    %cst_53 = arith.constant dense<0.000000e+00> : vector<8x128xf32>
    %176 = tpu.matmul %175, %26, %cst_53 {dimension_numbers = #tpu.dot_dimension_numbers<[1], [0], [0], [1], [0, 0, 1, 1], [], []>} : vector<8x32xbf16>, vector<32x128xbf16>, vector<8x128xf32> -> vector<8x128xf32>
    %177 = arith.addf %174, %176 : vector<8x128xf32>
    %178 = arith.negf %177 : vector<8x128xf32>
    %179 = math.exp %178 : vector<8x128xf32>
    %cst_54 = arith.constant 1.000000e+00 : f32
    %180 = vector.broadcast %cst_54 : f32 to vector<8x128xf32>
    %181 = arith.addf %180, %179 : vector<8x128xf32>
    %182 = arith.divf %180, %181 : vector<8x128xf32>
    %183 = math.tanh %177 : vector<8x128xf32>
    %184 = vector.extract_strided_slice %182 {offsets = [0, 0], sizes = [8, 32], strides = [1, 1]} : vector<8x128xf32> to vector<8x32xf32>
    %185 = vector.extract_strided_slice %182 {offsets = [0, 32], sizes = [8, 32], strides = [1, 1]} : vector<8x128xf32> to vector<8x32xf32>
    %186 = vector.extract_strided_slice %183 {offsets = [0, 64], sizes = [8, 32], strides = [1, 1]} : vector<8x128xf32> to vector<8x32xf32>
    %187 = vector.extract_strided_slice %182 {offsets = [0, 96], sizes = [8, 32], strides = [1, 1]} : vector<8x128xf32> to vector<8x32xf32>
    %188 = arith.mulf %185, %170 : vector<8x32xf32>
    %189 = arith.mulf %184, %186 : vector<8x32xf32>
    %190 = arith.addf %188, %189 : vector<8x32xf32>
    %191 = math.tanh %190 : vector<8x32xf32>
    %192 = arith.mulf %187, %191 : vector<8x32xf32>
    %c56 = arith.constant 56 : index
    %c0_55 = arith.constant 0 : index
    %193 = vector.load %arg6[%c56, %c0_55] : memref<64x32xf32, #tpu.memory_space<vmem>>, vector<8x32xf32>
    tpu.vector_store %arg6[%c56, %c0_55], %192 {strides = array<i32>} : memref<64x32xf32, #tpu.memory_space<vmem>>, vector<8x32xf32>,
    %c0_56 = arith.constant 0 : index
    %c0_57 = arith.constant 0 : index
    %194 = vector.load %arg6[%c0_56, %c0_57] : memref<64x32xf32, #tpu.memory_space<vmem>>, vector<64x32xf32>
    %195 = arith.truncf %194 : vector<64x32xf32> to vector<64x32xbf16>
    %cst_58 = arith.constant dense<0.000000e+00> : vector<64x128xf32>
    %196 = tpu.matmul %195, %27, %cst_58 {dimension_numbers = #tpu.dot_dimension_numbers<[1], [0], [0], [1], [0, 0, 1, 1], [], []>} : vector<64x32xbf16>, vector<32x128xbf16>, vector<64x128xf32> -> vector<64x128xf32>
    %197 = vector.broadcast %2 : vector<1x128xf32> to vector<64x128xf32>
    %198 = arith.addf %196, %197 : vector<64x128xf32>
    %199 = vector.extract_strided_slice %198 {offsets = [0, 0], sizes = [8, 128], strides = [1, 1]} : vector<64x128xf32> to vector<8x128xf32>
    %200 = arith.truncf %29 : vector<8x32xf32> to vector<8x32xbf16>
    %cst_59 = arith.constant dense<0.000000e+00> : vector<8x128xf32>
    %201 = tpu.matmul %200, %28, %cst_59 {dimension_numbers = #tpu.dot_dimension_numbers<[1], [0], [0], [1], [0, 0, 1, 1], [], []>} : vector<8x32xbf16>, vector<32x128xbf16>, vector<8x128xf32> -> vector<8x128xf32>
    %202 = arith.addf %199, %201 : vector<8x128xf32>
    %203 = arith.negf %202 : vector<8x128xf32>
    %204 = math.exp %203 : vector<8x128xf32>
    %cst_60 = arith.constant 1.000000e+00 : f32
    %205 = vector.broadcast %cst_60 : f32 to vector<8x128xf32>
    %206 = arith.addf %205, %204 : vector<8x128xf32>
    %207 = arith.divf %205, %206 : vector<8x128xf32>
    %208 = math.tanh %202 : vector<8x128xf32>
    %209 = vector.extract_strided_slice %207 {offsets = [0, 0], sizes = [8, 32], strides = [1, 1]} : vector<8x128xf32> to vector<8x32xf32>
    %210 = vector.extract_strided_slice %207 {offsets = [0, 32], sizes = [8, 32], strides = [1, 1]} : vector<8x128xf32> to vector<8x32xf32>
    %211 = vector.extract_strided_slice %208 {offsets = [0, 64], sizes = [8, 32], strides = [1, 1]} : vector<8x128xf32> to vector<8x32xf32>
    %212 = vector.extract_strided_slice %207 {offsets = [0, 96], sizes = [8, 32], strides = [1, 1]} : vector<8x128xf32> to vector<8x32xf32>
    %213 = arith.mulf %210, %29 : vector<8x32xf32>
    %214 = arith.mulf %209, %211 : vector<8x32xf32>
    %215 = arith.addf %213, %214 : vector<8x32xf32>
    %216 = math.tanh %215 : vector<8x32xf32>
    %217 = arith.mulf %212, %216 : vector<8x32xf32>
    %218 = vector.extract_strided_slice %198 {offsets = [8, 0], sizes = [8, 128], strides = [1, 1]} : vector<64x128xf32> to vector<8x128xf32>
    %219 = arith.truncf %217 : vector<8x32xf32> to vector<8x32xbf16>
    %cst_61 = arith.constant dense<0.000000e+00> : vector<8x128xf32>
    %220 = tpu.matmul %219, %28, %cst_61 {dimension_numbers = #tpu.dot_dimension_numbers<[1], [0], [0], [1], [0, 0, 1, 1], [], []>} : vector<8x32xbf16>, vector<32x128xbf16>, vector<8x128xf32> -> vector<8x128xf32>
    %221 = arith.addf %218, %220 : vector<8x128xf32>
    %222 = arith.negf %221 : vector<8x128xf32>
    %223 = math.exp %222 : vector<8x128xf32>
    %cst_62 = arith.constant 1.000000e+00 : f32
    %224 = vector.broadcast %cst_62 : f32 to vector<8x128xf32>
    %225 = arith.addf %224, %223 : vector<8x128xf32>
    %226 = arith.divf %224, %225 : vector<8x128xf32>
    %227 = math.tanh %221 : vector<8x128xf32>
    %228 = vector.extract_strided_slice %226 {offsets = [0, 0], sizes = [8, 32], strides = [1, 1]} : vector<8x128xf32> to vector<8x32xf32>
    %229 = vector.extract_strided_slice %226 {offsets = [0, 32], sizes = [8, 32], strides = [1, 1]} : vector<8x128xf32> to vector<8x32xf32>
    %230 = vector.extract_strided_slice %227 {offsets = [0, 64], sizes = [8, 32], strides = [1, 1]} : vector<8x128xf32> to vector<8x32xf32>
    %231 = vector.extract_strided_slice %226 {offsets = [0, 96], sizes = [8, 32], strides = [1, 1]} : vector<8x128xf32> to vector<8x32xf32>
    %232 = arith.mulf %229, %215 : vector<8x32xf32>
    %233 = arith.mulf %228, %230 : vector<8x32xf32>
    %234 = arith.addf %232, %233 : vector<8x32xf32>
    %235 = math.tanh %234 : vector<8x32xf32>
    %236 = arith.mulf %231, %235 : vector<8x32xf32>
    %237 = vector.extract_strided_slice %198 {offsets = [16, 0], sizes = [8, 128], strides = [1, 1]} : vector<64x128xf32> to vector<8x128xf32>
    %238 = arith.truncf %236 : vector<8x32xf32> to vector<8x32xbf16>
    %cst_63 = arith.constant dense<0.000000e+00> : vector<8x128xf32>
    %239 = tpu.matmul %238, %28, %cst_63 {dimension_numbers = #tpu.dot_dimension_numbers<[1], [0], [0], [1], [0, 0, 1, 1], [], []>} : vector<8x32xbf16>, vector<32x128xbf16>, vector<8x128xf32> -> vector<8x128xf32>
    %240 = arith.addf %237, %239 : vector<8x128xf32>
    %241 = arith.negf %240 : vector<8x128xf32>
    %242 = math.exp %241 : vector<8x128xf32>
    %cst_64 = arith.constant 1.000000e+00 : f32
    %243 = vector.broadcast %cst_64 : f32 to vector<8x128xf32>
    %244 = arith.addf %243, %242 : vector<8x128xf32>
    %245 = arith.divf %243, %244 : vector<8x128xf32>
    %246 = math.tanh %240 : vector<8x128xf32>
    %247 = vector.extract_strided_slice %245 {offsets = [0, 0], sizes = [8, 32], strides = [1, 1]} : vector<8x128xf32> to vector<8x32xf32>
    %248 = vector.extract_strided_slice %245 {offsets = [0, 32], sizes = [8, 32], strides = [1, 1]} : vector<8x128xf32> to vector<8x32xf32>
    %249 = vector.extract_strided_slice %246 {offsets = [0, 64], sizes = [8, 32], strides = [1, 1]} : vector<8x128xf32> to vector<8x32xf32>
    %250 = vector.extract_strided_slice %245 {offsets = [0, 96], sizes = [8, 32], strides = [1, 1]} : vector<8x128xf32> to vector<8x32xf32>
    %251 = arith.mulf %248, %234 : vector<8x32xf32>
    %252 = arith.mulf %247, %249 : vector<8x32xf32>
    %253 = arith.addf %251, %252 : vector<8x32xf32>
    %254 = math.tanh %253 : vector<8x32xf32>
    %255 = arith.mulf %250, %254 : vector<8x32xf32>
    %256 = vector.extract_strided_slice %198 {offsets = [24, 0], sizes = [8, 128], strides = [1, 1]} : vector<64x128xf32> to vector<8x128xf32>
    %257 = arith.truncf %255 : vector<8x32xf32> to vector<8x32xbf16>
    %cst_65 = arith.constant dense<0.000000e+00> : vector<8x128xf32>
    %258 = tpu.matmul %257, %28, %cst_65 {dimension_numbers = #tpu.dot_dimension_numbers<[1], [0], [0], [1], [0, 0, 1, 1], [], []>} : vector<8x32xbf16>, vector<32x128xbf16>, vector<8x128xf32> -> vector<8x128xf32>
    %259 = arith.addf %256, %258 : vector<8x128xf32>
    %260 = arith.negf %259 : vector<8x128xf32>
    %261 = math.exp %260 : vector<8x128xf32>
    %cst_66 = arith.constant 1.000000e+00 : f32
    %262 = vector.broadcast %cst_66 : f32 to vector<8x128xf32>
    %263 = arith.addf %262, %261 : vector<8x128xf32>
    %264 = arith.divf %262, %263 : vector<8x128xf32>
    %265 = math.tanh %259 : vector<8x128xf32>
    %266 = vector.extract_strided_slice %264 {offsets = [0, 0], sizes = [8, 32], strides = [1, 1]} : vector<8x128xf32> to vector<8x32xf32>
    %267 = vector.extract_strided_slice %264 {offsets = [0, 32], sizes = [8, 32], strides = [1, 1]} : vector<8x128xf32> to vector<8x32xf32>
    %268 = vector.extract_strided_slice %265 {offsets = [0, 64], sizes = [8, 32], strides = [1, 1]} : vector<8x128xf32> to vector<8x32xf32>
    %269 = vector.extract_strided_slice %264 {offsets = [0, 96], sizes = [8, 32], strides = [1, 1]} : vector<8x128xf32> to vector<8x32xf32>
    %270 = arith.mulf %267, %253 : vector<8x32xf32>
    %271 = arith.mulf %266, %268 : vector<8x32xf32>
    %272 = arith.addf %270, %271 : vector<8x32xf32>
    %273 = math.tanh %272 : vector<8x32xf32>
    %274 = arith.mulf %269, %273 : vector<8x32xf32>
    %275 = vector.extract_strided_slice %198 {offsets = [32, 0], sizes = [8, 128], strides = [1, 1]} : vector<64x128xf32> to vector<8x128xf32>
    %276 = arith.truncf %274 : vector<8x32xf32> to vector<8x32xbf16>
    %cst_67 = arith.constant dense<0.000000e+00> : vector<8x128xf32>
    %277 = tpu.matmul %276, %28, %cst_67 {dimension_numbers = #tpu.dot_dimension_numbers<[1], [0], [0], [1], [0, 0, 1, 1], [], []>} : vector<8x32xbf16>, vector<32x128xbf16>, vector<8x128xf32> -> vector<8x128xf32>
    %278 = arith.addf %275, %277 : vector<8x128xf32>
    %279 = arith.negf %278 : vector<8x128xf32>
    %280 = math.exp %279 : vector<8x128xf32>
    %cst_68 = arith.constant 1.000000e+00 : f32
    %281 = vector.broadcast %cst_68 : f32 to vector<8x128xf32>
    %282 = arith.addf %281, %280 : vector<8x128xf32>
    %283 = arith.divf %281, %282 : vector<8x128xf32>
    %284 = math.tanh %278 : vector<8x128xf32>
    %285 = vector.extract_strided_slice %283 {offsets = [0, 0], sizes = [8, 32], strides = [1, 1]} : vector<8x128xf32> to vector<8x32xf32>
    %286 = vector.extract_strided_slice %283 {offsets = [0, 32], sizes = [8, 32], strides = [1, 1]} : vector<8x128xf32> to vector<8x32xf32>
    %287 = vector.extract_strided_slice %284 {offsets = [0, 64], sizes = [8, 32], strides = [1, 1]} : vector<8x128xf32> to vector<8x32xf32>
    %288 = vector.extract_strided_slice %283 {offsets = [0, 96], sizes = [8, 32], strides = [1, 1]} : vector<8x128xf32> to vector<8x32xf32>
    %289 = arith.mulf %286, %272 : vector<8x32xf32>
    %290 = arith.mulf %285, %287 : vector<8x32xf32>
    %291 = arith.addf %289, %290 : vector<8x32xf32>
    %292 = math.tanh %291 : vector<8x32xf32>
    %293 = arith.mulf %288, %292 : vector<8x32xf32>
    %294 = vector.extract_strided_slice %198 {offsets = [40, 0], sizes = [8, 128], strides = [1, 1]} : vector<64x128xf32> to vector<8x128xf32>
    %295 = arith.truncf %293 : vector<8x32xf32> to vector<8x32xbf16>
    %cst_69 = arith.constant dense<0.000000e+00> : vector<8x128xf32>
    %296 = tpu.matmul %295, %28, %cst_69 {dimension_numbers = #tpu.dot_dimension_numbers<[1], [0], [0], [1], [0, 0, 1, 1], [], []>} : vector<8x32xbf16>, vector<32x128xbf16>, vector<8x128xf32> -> vector<8x128xf32>
    %297 = arith.addf %294, %296 : vector<8x128xf32>
    %298 = arith.negf %297 : vector<8x128xf32>
    %299 = math.exp %298 : vector<8x128xf32>
    %cst_70 = arith.constant 1.000000e+00 : f32
    %300 = vector.broadcast %cst_70 : f32 to vector<8x128xf32>
    %301 = arith.addf %300, %299 : vector<8x128xf32>
    %302 = arith.divf %300, %301 : vector<8x128xf32>
    %303 = math.tanh %297 : vector<8x128xf32>
    %304 = vector.extract_strided_slice %302 {offsets = [0, 0], sizes = [8, 32], strides = [1, 1]} : vector<8x128xf32> to vector<8x32xf32>
    %305 = vector.extract_strided_slice %302 {offsets = [0, 32], sizes = [8, 32], strides = [1, 1]} : vector<8x128xf32> to vector<8x32xf32>
    %306 = vector.extract_strided_slice %303 {offsets = [0, 64], sizes = [8, 32], strides = [1, 1]} : vector<8x128xf32> to vector<8x32xf32>
    %307 = vector.extract_strided_slice %302 {offsets = [0, 96], sizes = [8, 32], strides = [1, 1]} : vector<8x128xf32> to vector<8x32xf32>
    %308 = arith.mulf %305, %291 : vector<8x32xf32>
    %309 = arith.mulf %304, %306 : vector<8x32xf32>
    %310 = arith.addf %308, %309 : vector<8x32xf32>
    %311 = math.tanh %310 : vector<8x32xf32>
    %312 = arith.mulf %307, %311 : vector<8x32xf32>
    %313 = vector.extract_strided_slice %198 {offsets = [48, 0], sizes = [8, 128], strides = [1, 1]} : vector<64x128xf32> to vector<8x128xf32>
    %314 = arith.truncf %312 : vector<8x32xf32> to vector<8x32xbf16>
    %cst_71 = arith.constant dense<0.000000e+00> : vector<8x128xf32>
    %315 = tpu.matmul %314, %28, %cst_71 {dimension_numbers = #tpu.dot_dimension_numbers<[1], [0], [0], [1], [0, 0, 1, 1], [], []>} : vector<8x32xbf16>, vector<32x128xbf16>, vector<8x128xf32> -> vector<8x128xf32>
    %316 = arith.addf %313, %315 : vector<8x128xf32>
    %317 = arith.negf %316 : vector<8x128xf32>
    %318 = math.exp %317 : vector<8x128xf32>
    %cst_72 = arith.constant 1.000000e+00 : f32
    %319 = vector.broadcast %cst_72 : f32 to vector<8x128xf32>
    %320 = arith.addf %319, %318 : vector<8x128xf32>
    %321 = arith.divf %319, %320 : vector<8x128xf32>
    %322 = math.tanh %316 : vector<8x128xf32>
    %323 = vector.extract_strided_slice %321 {offsets = [0, 0], sizes = [8, 32], strides = [1, 1]} : vector<8x128xf32> to vector<8x32xf32>
    %324 = vector.extract_strided_slice %321 {offsets = [0, 32], sizes = [8, 32], strides = [1, 1]} : vector<8x128xf32> to vector<8x32xf32>
    %325 = vector.extract_strided_slice %322 {offsets = [0, 64], sizes = [8, 32], strides = [1, 1]} : vector<8x128xf32> to vector<8x32xf32>
    %326 = vector.extract_strided_slice %321 {offsets = [0, 96], sizes = [8, 32], strides = [1, 1]} : vector<8x128xf32> to vector<8x32xf32>
    %327 = arith.mulf %324, %310 : vector<8x32xf32>
    %328 = arith.mulf %323, %325 : vector<8x32xf32>
    %329 = arith.addf %327, %328 : vector<8x32xf32>
    %330 = math.tanh %329 : vector<8x32xf32>
    %331 = arith.mulf %326, %330 : vector<8x32xf32>
    %332 = vector.extract_strided_slice %198 {offsets = [56, 0], sizes = [8, 128], strides = [1, 1]} : vector<64x128xf32> to vector<8x128xf32>
    %333 = arith.truncf %331 : vector<8x32xf32> to vector<8x32xbf16>
    %cst_73 = arith.constant dense<0.000000e+00> : vector<8x128xf32>
    %334 = tpu.matmul %333, %28, %cst_73 {dimension_numbers = #tpu.dot_dimension_numbers<[1], [0], [0], [1], [0, 0, 1, 1], [], []>} : vector<8x32xbf16>, vector<32x128xbf16>, vector<8x128xf32> -> vector<8x128xf32>
    %335 = arith.addf %332, %334 : vector<8x128xf32>
    %336 = arith.negf %335 : vector<8x128xf32>
    %337 = math.exp %336 : vector<8x128xf32>
    %cst_74 = arith.constant 1.000000e+00 : f32
    %338 = vector.broadcast %cst_74 : f32 to vector<8x128xf32>
    %339 = arith.addf %338, %337 : vector<8x128xf32>
    %340 = arith.divf %338, %339 : vector<8x128xf32>
    %341 = math.tanh %335 : vector<8x128xf32>
    %342 = vector.extract_strided_slice %340 {offsets = [0, 0], sizes = [8, 32], strides = [1, 1]} : vector<8x128xf32> to vector<8x32xf32>
    %343 = vector.extract_strided_slice %340 {offsets = [0, 32], sizes = [8, 32], strides = [1, 1]} : vector<8x128xf32> to vector<8x32xf32>
    %344 = vector.extract_strided_slice %341 {offsets = [0, 64], sizes = [8, 32], strides = [1, 1]} : vector<8x128xf32> to vector<8x32xf32>
    %345 = vector.extract_strided_slice %340 {offsets = [0, 96], sizes = [8, 32], strides = [1, 1]} : vector<8x128xf32> to vector<8x32xf32>
    %346 = arith.mulf %343, %329 : vector<8x32xf32>
    %347 = arith.mulf %342, %344 : vector<8x32xf32>
    %348 = arith.addf %346, %347 : vector<8x32xf32>
    %349 = math.tanh %348 : vector<8x32xf32>
    %350 = arith.mulf %345, %349 : vector<8x32xf32>
    %351 = arith.truncf %350 : vector<8x32xf32> to vector<8x32xbf16>
    %c0_75 = arith.constant 0 : index
    %c0_76 = arith.constant 0 : index
    %352 = vector.load %arg3[%c0_75, %c0_76] : memref<32x5xbf16, #tpu.memory_space<vmem>>, vector<32x5xbf16>
    %cst_77 = arith.constant dense<0.000000e+00> : vector<8x5xf32>
    %353 = tpu.matmul %351, %352, %cst_77 {dimension_numbers = #tpu.dot_dimension_numbers<[1], [0], [0], [1], [0, 0, 1, 1], [], []>} : vector<8x32xbf16>, vector<32x5xbf16>, vector<8x5xf32> -> vector<8x5xf32>
    %354 = vector.broadcast %3 : vector<1x5xf32> to vector<8x5xf32>
    %355 = arith.addf %353, %354 : vector<8x5xf32>
    %c0_78 = arith.constant 0 : index
    %c0_79 = arith.constant 0 : index
    %356 = vector.load %arg5[%c0_78, %c0_79] : memref<8x5xf32, #tpu.memory_space<vmem>>, vector<8x5xf32>
    tpu.vector_store %arg5[%c0_78, %c0_79], %355 {strides = array<i32>} : memref<8x5xf32, #tpu.memory_space<vmem>>, vector<8x5xf32>,
    return
  }
}

</mosaic_0001>

<llo_original>
// kernel: cnn_lstm_forward.1
$region0: #{cnn_lstm_forward.1}
  #allocation0 [shape = 'u32[]', space=smem, size = 0x4, offset = 0x4, fixed_abs, tag = 'smem constant byte address 0x4 - core index']
  #allocation1 [shape = 'u32[144,128]{1,0:T(1,128)}', space=vmem, size = 0x12000, scoped, tag = 'internal scratch']
  #allocation2 [shape = 'f32[64,32]{1,0:T(8,128)}', space=vmem, size = 0x8000, scoped, tag = 'scratch operand']
  %s0 = inlined_call_operand.vmem [shape: f32[80,4], index: 0, kind: input, shape index: {}]
  %s1 = inlined_call_operand.vmem [shape: bf16[3,4,16], index: 1, kind: input, shape index: {}]
  %s2 = inlined_call_operand.vmem [shape: bf16[112,128], index: 2, kind: input, shape index: {}]
  %s3 = inlined_call_operand.vmem [shape: bf16[32,5], index: 3, kind: input, shape index: {}]
  %s4 = inlined_call_operand.vmem [shape: f32[4,128], index: 4, kind: input, shape index: {}]
  %s5 = inlined_call_operand.vmem [shape: f32[8,5], index: 5, kind: output, shape index: {}]
  %s6 = sld [smem:[#allocation0]]
  $region30: #{cnn_lstm_forward.1} parent=0
    _
  %s8 = ssub.s32 1, %s6
  %s9 = scalar_select 0, %s8, %s6
  // Predicated region
  $region2: #{cnn_lstm_forward.1} parent=0 // pred_check
    _
  $region3: #{cnn_lstm_forward.1} parent=0 // pred_check_branch
    %11 = sbr.rel (0) target = $region5
  $region4: #{cnn_lstm_forward.1} parent=0 // pred_region
    _
  $region5: #{cnn_lstm_forward.1} parent=0 // pred_fallthru
    _
  // Predicated region
  $region6: #{cnn_lstm_forward.1} parent=0 // pred_check
    _
  $region7: #{cnn_lstm_forward.1} parent=0 // pred_check_branch
    %13 = sbr.rel (0) target = $region9
  $region8: #{cnn_lstm_forward.1} parent=0 // pred_region
    _
  $region9: #{cnn_lstm_forward.1} parent=0 // pred_fallthru
    _
  // Predicated region
  $region10: #{cnn_lstm_forward.1} parent=0 // pred_check
    _
  $region11: #{cnn_lstm_forward.1} parent=0 // pred_check_branch
    %15 = sbr.rel (0) target = $region13
  $region12: #{cnn_lstm_forward.1} parent=0 // pred_region
    _
  $region13: #{cnn_lstm_forward.1} parent=0 // pred_fallthru
    _
  // Predicated region
  $region14: #{cnn_lstm_forward.1} parent=0 // pred_check
    _
  $region15: #{cnn_lstm_forward.1} parent=0 // pred_check_branch
    %17 = sbr.rel (0) target = $region17
  $region16: #{cnn_lstm_forward.1} parent=0 // pred_region
    _
  $region17: #{cnn_lstm_forward.1} parent=0 // pred_fallthru
    _
  // Predicated region
  $region18: #{cnn_lstm_forward.1} parent=0 // pred_check
    _
  $region19: #{cnn_lstm_forward.1} parent=0 // pred_check_branch
    %19 = sbr.rel (0) target = $region21
  $region20: #{cnn_lstm_forward.1} parent=0 // pred_region
    _
  $region21: #{cnn_lstm_forward.1} parent=0 // pred_fallthru
    _
  %v21 = vld [vmem:[%s4] sm:$0x1]
  %v22 = vld [vmem:[%s4 + $0x1] sm:$0x1]
  %v23 = vld [vmem:[%s4 + $0x2] sm:$0x1]
  %v24 = vld [vmem:[%s4 + $0x3] sm:$0x1]
  %v25 = vld [vmem:[%s0] sm:$0xff]
  %v26 = vld [vmem:[%s0 + $0x8] sm:$0xff]
  %v27 = vld [vmem:[%s0 + $0x10] sm:$0xff]
  %v28 = vld [vmem:[%s0 + $0x18] sm:$0xff]
  %v29 = vld [vmem:[%s0 + $0x20] sm:$0xff]
  %v30 = vld [vmem:[%s0 + $0x28] sm:$0xff]
  %v31 = vld [vmem:[%s0 + $0x30] sm:$0xff]
  %v32 = vld [vmem:[%s0 + $0x38] sm:$0xff]
  %v33 = vpack.c.bf16 %v26, %v25
  %v34 = vpack.c.bf16 %v28, %v27
  %v35 = vpack.c.bf16 %v30, %v29
  %v36 = vpack.c.bf16 %v32, %v31
  %v37 = vld [vmem:[%s0 + $0x40] sm:$0xff]
  %v38 = vpack.c.bf16 %v27, %v26
  %v39 = vpack.c.bf16 %v29, %v28
  %v40 = vpack.c.bf16 %v31, %v30
  %v41 = vpack.c.bf16 %v37, %v32
  %v42 = vld [vmem:[%s0 + $0x48] sm:$0xff]
  %v43 = vpack.c.bf16 %v42, %v37
  %v44 = vld [vmem:[%s1] sm:$0x3]
  %s45 = scalar_lea.vmem %s1, 2
  %v46 = vld [vmem:[%s45] sm:$0x3]
  %vm47 = vcmask 31744
  %v49 = vsel %vm47, %v38, 0
  %v52 = vsel %vm47, %v39, 0
  %v55 = vsel %vm47, %v40, 0
  %v58 = vsel %vm47, %v41, 0
  %vm60 = vcmask 1041408
  %v62 = vsel %vm60, %v46, 0
  %64 = vmatprep.subr.bf16.mxu0 0
  %65 = vmatpush1.bf16.msra.mxu0 %v62
  %66 = vmatprep.subr.bf16.mxu0 0
  %67 = vmatpush1.bf16.msra.mxu0 0
  %68 = vmatprep.subr.bf16.mxu0 0
  %69 = vmatpush1.bf16.msra.mxu0 0
  %70 = vmatprep.subr.bf16.mxu0 0
  %71 = vmatpush1.bf16.msra.mxu0 0
  %72 = vmatprep.subr.bf16.mxu0 0
  %73 = vmatpush1.bf16.msra.mxu0 0
  %74 = vmatprep.subr.bf16.mxu0 0
  %75 = vmatpush1.bf16.msra.mxu0 0
  %76 = vmatprep.subr.bf16.mxu0 0
  %77 = vmatpush1.bf16.msra.mxu0 0
  %78 = vmatprep.subr.bf16.mxu0 0
  %79 = vmatpush1.bf16.msra.mxu0 0
  %80 = vmatprep.subr.bf16.mxu0 0
  %81 = vmatpush1.bf16.msra.mxu0 0
  %82 = vmatprep.subr.bf16.mxu0 0
  %83 = vmatpush1.bf16.msra.mxu0 0
  %84 = vmatprep.subr.bf16.mxu0 0
  %85 = vmatpush1.bf16.msra.mxu0 0
  %86 = vmatprep.subr.bf16.mxu0 0
  %87 = vmatpush1.bf16.msra.mxu0 0
  %88 = vmatprep.subr.bf16.mxu0 0
  %89 = vmatpush1.bf16.msra.mxu0 0
  %90 = vmatprep.subr.bf16.mxu0 0
  %91 = vmatpush1.bf16.msra.mxu0 0
  %92 = vmatprep.subr.bf16.mxu0 0
  %93 = vmatpush1.bf16.msra.mxu0 0
  %94 = vmatprep.subr.bf16.mxu0 0
  %95 = vmatpush1.bf16.msra.mxu0 0
  %96 = vmatprep.mubr.bf16.mxu0 0
  %97 = vmatmul.mubr.bf16.gmra.mrb[0].mxu0 %v49
  %v98 = vpop.f32.mrb[0].mxu0
  %v99 = vadd.f32 0.0, %v98
  %v100 = vpop.f32.mrb[0].mxu0
  %v101 = vpop.f32.mrb[0].mxu0
  %v102 = vadd.f32 0.0, %v101
  %v103 = vpop.f32.mrb[0].mxu0
  %104 = vmatprep.mubr.bf16.mxu0 0
  %105 = vmatmul.mubr.bf16.gmra.mrb[0].mxu0 %v52
  %v106 = vpop.f32.mrb[0].mxu0
  %v107 = vadd.f32 0.0, %v106
  %v108 = vpop.f32.mrb[0].mxu0
  %v109 = vpop.f32.mrb[0].mxu0
  %v110 = vadd.f32 0.0, %v109
  %v111 = vpop.f32.mrb[0].mxu0
  %112 = vmatprep.mubr.bf16.mxu0 0
  %113 = vmatmul.mubr.bf16.gmra.mrb[0].mxu0 %v55
  %v114 = vpop.f32.mrb[0].mxu0
  %v115 = vadd.f32 0.0, %v114
  %v116 = vpop.f32.mrb[0].mxu0
  %v117 = vpop.f32.mrb[0].mxu0
  %v118 = vadd.f32 0.0, %v117
  %v119 = vpop.f32.mrb[0].mxu0
  %120 = vmatprep.mubr.bf16.mxu0 0
  %121 = vmatmul.mubr.bf16.gmra.mrb[0].mxu0 %v58
  %v122 = vpop.f32.mrb[0].mxu0
  %v123 = vadd.f32 0.0, %v122
  %v124 = vpop.f32.mrb[0].mxu0
  %v125 = vpop.f32.mrb[0].mxu0
  %v126 = vadd.f32 0.0, %v125
  %v127 = vpop.f32.mrb[0].mxu0
  %128 = vdwg.mxu0
  %v130 = vsel %vm47, %v33, 0
  %v133 = vsel %vm47, %v34, 0
  %v136 = vsel %vm47, %v35, 0
  %v139 = vsel %vm47, %v36, 0
  %v142 = vsel %vm60, %v44, 0
  %144 = vmatprep.subr.bf16.mxu0 0
  %145 = vmatpush1.bf16.msra.mxu0 %v142
  %146 = vmatprep.subr.bf16.mxu0 0
  %147 = vmatpush1.bf16.msra.mxu0 0
  %148 = vmatprep.subr.bf16.mxu0 0
  %149 = vmatpush1.bf16.msra.mxu0 0
  %150 = vmatprep.subr.bf16.mxu0 0
  %151 = vmatpush1.bf16.msra.mxu0 0
  %152 = vmatprep.subr.bf16.mxu0 0
  %153 = vmatpush1.bf16.msra.mxu0 0
  %154 = vmatprep.subr.bf16.mxu0 0
  %155 = vmatpush1.bf16.msra.mxu0 0
  %156 = vmatprep.subr.bf16.mxu0 0
  %157 = vmatpush1.bf16.msra.mxu0 0
  %158 = vmatprep.subr.bf16.mxu0 0
  %159 = vmatpush1.bf16.msra.mxu0 0
  %160 = vmatprep.subr.bf16.mxu0 0
  %161 = vmatpush1.bf16.msra.mxu0 0
  %162 = vmatprep.subr.bf16.mxu0 0
  %163 = vmatpush1.bf16.msra.mxu0 0
  %164 = vmatprep.subr.bf16.mxu0 0
  %165 = vmatpush1.bf16.msra.mxu0 0
  %166 = vmatprep.subr.bf16.mxu0 0
  %167 = vmatpush1.bf16.msra.mxu0 0
  %168 = vmatprep.subr.bf16.mxu0 0
  %169 = vmatpush1.bf16.msra.mxu0 0
  %170 = vmatprep.subr.bf16.mxu0 0
  %171 = vmatpush1.bf16.msra.mxu0 0
  %172 = vmatprep.subr.bf16.mxu0 0
  %173 = vmatpush1.bf16.msra.mxu0 0
  %174 = vmatprep.subr.bf16.mxu0 0
  %175 = vmatpush1.bf16.msra.mxu0 0
  %176 = vmatprep.mubr.bf16.mxu0 0
  %177 = vmatmul.mubr.bf16.gmra.mrb[0].mxu0 %v130
  %v178 = vpop.f32.mrb[0].mxu0
  %v179 = vadd.f32 %v99, %v178
  %v180 = vpop.f32.mrb[0].mxu0
  %v181 = vpop.f32.mrb[0].mxu0
  %v182 = vadd.f32 %v102, %v181
  %v183 = vpop.f32.mrb[0].mxu0
  %184 = vmatprep.mubr.bf16.mxu0 0
  %185 = vmatmul.mubr.bf16.gmra.mrb[0].mxu0 %v133
  %v186 = vpop.f32.mrb[0].mxu0
  %v187 = vadd.f32 %v107, %v186
  %v188 = vpop.f32.mrb[0].mxu0
  %v189 = vpop.f32.mrb[0].mxu0
  %v190 = vadd.f32 %v110, %v189
  %v191 = vpop.f32.mrb[0].mxu0
  %192 = vmatprep.mubr.bf16.mxu0 0
  %193 = vmatmul.mubr.bf16.gmra.mrb[0].mxu0 %v136
  %v194 = vpop.f32.mrb[0].mxu0
  %v195 = vadd.f32 %v115, %v194
  %v196 = vpop.f32.mrb[0].mxu0
  %v197 = vpop.f32.mrb[0].mxu0
  %v198 = vadd.f32 %v118, %v197
  %v199 = vpop.f32.mrb[0].mxu0
  %200 = vmatprep.mubr.bf16.mxu0 0
  %201 = vmatmul.mubr.bf16.gmra.mrb[0].mxu0 %v139
  %v202 = vpop.f32.mrb[0].mxu0
  %v203 = vadd.f32 %v123, %v202
  %v204 = vpop.f32.mrb[0].mxu0
  %v205 = vpop.f32.mrb[0].mxu0
  %v206 = vadd.f32 %v126, %v205
  %v207 = vpop.f32.mrb[0].mxu0
  %208 = vdwg.mxu0
  %s209 = scalar_lea.vmem %s1, 4
  %v210 = vld [vmem:[%s209] sm:$0x3]
  %v212 = vsel %vm47, %v43, 0
  %v215 = vsel %vm60, %v210, 0
  %217 = vmatprep.subr.bf16.mxu0 0
  %218 = vmatpush1.bf16.msra.mxu0 %v215
  %219 = vmatprep.subr.bf16.mxu0 0
  %220 = vmatpush1.bf16.msra.mxu0 0
  %221 = vmatprep.subr.bf16.mxu0 0
  %222 = vmatpush1.bf16.msra.mxu0 0
  %223 = vmatprep.subr.bf16.mxu0 0
  %224 = vmatpush1.bf16.msra.mxu0 0
  %225 = vmatprep.subr.bf16.mxu0 0
  %226 = vmatpush1.bf16.msra.mxu0 0
  %227 = vmatprep.subr.bf16.mxu0 0
  %228 = vmatpush1.bf16.msra.mxu0 0
  %229 = vmatprep.subr.bf16.mxu0 0
  %230 = vmatpush1.bf16.msra.mxu0 0
  %231 = vmatprep.subr.bf16.mxu0 0
  %232 = vmatpush1.bf16.msra.mxu0 0
  %233 = vmatprep.subr.bf16.mxu0 0
  %234 = vmatpush1.bf16.msra.mxu0 0
  %235 = vmatprep.subr.bf16.mxu0 0
  %236 = vmatpush1.bf16.msra.mxu0 0
  %237 = vmatprep.subr.bf16.mxu0 0
  %238 = vmatpush1.bf16.msra.mxu0 0
  %239 = vmatprep.subr.bf16.mxu0 0
  %240 = vmatpush1.bf16.msra.mxu0 0
  %241 = vmatprep.subr.bf16.mxu0 0
  %242 = vmatpush1.bf16.msra.mxu0 0
  %243 = vmatprep.subr.bf16.mxu0 0
  %244 = vmatpush1.bf16.msra.mxu0 0
  %245 = vmatprep.subr.bf16.mxu0 0
  %246 = vmatpush1.bf16.msra.mxu0 0
  %247 = vmatprep.subr.bf16.mxu0 0
  %248 = vmatpush1.bf16.msra.mxu0 0
  %249 = vmatprep.mubr.bf16.mxu0 0
  %250 = vmatmul.mubr.bf16.gmra.mrb[0].mxu0 %v133
  %v251 = vpop.f32.mrb[0].mxu0
  %v252 = vadd.f32 0.0, %v251
  %v253 = vpop.f32.mrb[0].mxu0
  %v254 = vpop.f32.mrb[0].mxu0
  %v255 = vadd.f32 0.0, %v254
  %v256 = vpop.f32.mrb[0].mxu0
  %257 = vmatprep.mubr.bf16.mxu0 0
  %258 = vmatmul.mubr.bf16.gmra.mrb[0].mxu0 %v136
  %v259 = vpop.f32.mrb[0].mxu0
  %v260 = vadd.f32 0.0, %v259
  %v261 = vpop.f32.mrb[0].mxu0
  %v262 = vpop.f32.mrb[0].mxu0
  %v263 = vadd.f32 0.0, %v262
  %v264 = vpop.f32.mrb[0].mxu0
  %265 = vmatprep.mubr.bf16.mxu0 0
  %266 = vmatmul.mubr.bf16.gmra.mrb[0].mxu0 %v139
  %v267 = vpop.f32.mrb[0].mxu0
  %v268 = vadd.f32 0.0, %v267
  %v269 = vpop.f32.mrb[0].mxu0
  %v270 = vpop.f32.mrb[0].mxu0
  %v271 = vadd.f32 0.0, %v270
  %v272 = vpop.f32.mrb[0].mxu0
  %273 = vmatprep.mubr.bf16.mxu0 0
  %274 = vmatmul.mubr.bf16.gmra.mrb[0].mxu0 %v212
  %v275 = vpop.f32.mrb[0].mxu0
  %v276 = vadd.f32 0.0, %v275
  %v277 = vpop.f32.mrb[0].mxu0
  %v278 = vpop.f32.mrb[0].mxu0
  %v279 = vadd.f32 0.0, %v278
  %v280 = vpop.f32.mrb[0].mxu0
  %281 = vdwg.mxu0
  %v282 = vadd.f32 %v179, %v252
  %v283 = vadd.f32 %v182, %v255
  %v284 = vadd.f32 %v187, %v260
  %v285 = vadd.f32 %v190, %v263
  %v286 = vadd.f32 %v195, %v268
  %v287 = vadd.f32 %v198, %v271
  %v288 = vadd.f32 %v203, %v276
  %v289 = vadd.f32 %v206, %v279
  %v290 = vlaneseq
  %v291 = vshrl.u32 %v290, 7
  %v292 = vsub.s32 0, %v291
  %v293 = vrot.slane %v21, %v292
  %v294 = vadd.f32 %v282, %v293
  %v295 = vadd.f32 %v283, %v293
  %v296 = vadd.f32 %v284, %v293
  %v297 = vadd.f32 %v285, %v293
  %v298 = vadd.f32 %v286, %v293
  %v299 = vadd.f32 %v287, %v293
  %v300 = vadd.f32 %v288, %v293
  %v301 = vadd.f32 %v289, %v293
  %v302 = vmax.f32 %v294, 0.0
  %v303 = vmax.f32 %v295, 0.0
  %v304 = vmax.f32 %v296, 0.0
  %v305 = vmax.f32 %v297, 0.0
  %v306 = vmax.f32 %v298, 0.0
  %v307 = vmax.f32 %v299, 0.0
  %v308 = vmax.f32 %v300, 0.0
  %v309 = vmax.f32 %v301, 0.0
  %v310 = vld [vmem:[%s2] sm:$0xf]
  %v311 = vld [vmem:[%s2 + $0x4] sm:$0xf]
  %v312 = vld [vmem:[%s2 + $0x8] sm:$0xf]
  %v313 = vld [vmem:[%s2 + $0xc] sm:$0xf]
  %v314 = vld [vmem:[%s2 + $0x10] sm:$0xf]
  %v315 = vld [vmem:[%s2 + $0x14] sm:$0xf]
  %v316 = vld [vmem:[%s2 + $0x18] sm:$0xf]
  %v317 = vld [vmem:[%s2 + $0x1c] sm:$0xf]
  %v318 = vld [vmem:[%s2 + $0x20] sm:$0xf]
  %v319 = vld [vmem:[%s2 + $0x24] sm:$0xf]
  %v320 = vld [vmem:[%s2 + $0x28] sm:$0xf]
  %v321 = vld [vmem:[%s2 + $0x2c] sm:$0xf]
  %v322 = vld [vmem:[%s2 + $0x30] sm:$0xf]
  %v323 = vld [vmem:[%s2 + $0x34] sm:$0xf]
  %v324 = vpack.c.bf16 %v303, %v302
  %v325 = vpack.c.bf16 %v305, %v304
  %v326 = vpack.c.bf16 %v307, %v306
  %v327 = vpack.c.bf16 %v309, %v308
  %v328 = vlaneseq
  %v329 = vshrl.u32 %v328, 7
  %v330 = vsub.s32 0, %v329
  %v331 = vrot.slane %v22, %v330
  %v334 = vunpack.c.l.b16 %v310
  %v335 = vunpack.c.l.b16 %v311
  %v336 = vpack.c.b16 %v335, %v334
  %vm338 = vcmask 130048
  %v340 = vsel %vm338, %v324, 0
  %v343 = vsel %vm338, %v325, 0
  %v346 = vsel %vm338, %v326, 0
  %v349 = vsel %vm338, %v327, 0
  %351 = vmatprep.subr.bf16.mxu0 0
  %352 = vmatpush1.bf16.msra.mxu0 %v336
  %353 = vmatprep.subr.bf16.mxu0 0
  %354 = vmatpush1.bf16.msra.mxu0 0
  %355 = vmatprep.subr.bf16.mxu0 0
  %356 = vmatpush1.bf16.msra.mxu0 0
  %357 = vmatprep.subr.bf16.mxu0 0
  %358 = vmatpush1.bf16.msra.mxu0 0
  %359 = vmatprep.subr.bf16.mxu0 0
  %360 = vmatpush1.bf16.msra.mxu0 0
  %361 = vmatprep.subr.bf16.mxu0 0
  %362 = vmatpush1.bf16.msra.mxu0 0
  %363 = vmatprep.subr.bf16.mxu0 0
  %364 = vmatpush1.bf16.msra.mxu0 0
  %365 = vmatprep.subr.bf16.mxu0 0
  %366 = vmatpush1.bf16.msra.mxu0 0
  %367 = vmatprep.subr.bf16.mxu0 0
  %368 = vmatpush1.bf16.msra.mxu0 0
  %369 = vmatprep.subr.bf16.mxu0 0
  %370 = vmatpush1.bf16.msra.mxu0 0
  %371 = vmatprep.subr.bf16.mxu0 0
  %372 = vmatpush1.bf16.msra.mxu0 0
  %373 = vmatprep.subr.bf16.mxu0 0
  %374 = vmatpush1.bf16.msra.mxu0 0
  %375 = vmatprep.subr.bf16.mxu0 0
  %376 = vmatpush1.bf16.msra.mxu0 0
  %377 = vmatprep.subr.bf16.mxu0 0
  %378 = vmatpush1.bf16.msra.mxu0 0
  %379 = vmatprep.subr.bf16.mxu0 0
  %380 = vmatpush1.bf16.msra.mxu0 0
  %381 = vmatprep.subr.bf16.mxu0 0
  %382 = vmatpush1.bf16.msra.mxu0 0
  %383 = vmatprep.mubr.bf16.mxu0 0
  %384 = vmatmul.mubr.bf16.gmra.mrb[0].mxu0 %v340
  %v385 = vpop.f32.mrb[0].mxu0
  %v386 = vadd.f32 %v331, %v385
  %v387 = vpop.f32.mrb[0].mxu0
  %v388 = vpop.f32.mrb[0].mxu0
  %v389 = vadd.f32 %v331, %v388
  %v390 = vpop.f32.mrb[0].mxu0
  %391 = vmatprep.mubr.bf16.mxu0 0
  %392 = vmatmul.mubr.bf16.gmra.mrb[0].mxu0 %v343
  %v393 = vpop.f32.mrb[0].mxu0
  %v394 = vadd.f32 %v331, %v393
  %v395 = vpop.f32.mrb[0].mxu0
  %v396 = vpop.f32.mrb[0].mxu0
  %v397 = vadd.f32 %v331, %v396
  %v398 = vpop.f32.mrb[0].mxu0
  %399 = vmatprep.mubr.bf16.mxu0 0
  %400 = vmatmul.mubr.bf16.gmra.mrb[0].mxu0 %v346
  %v401 = vpop.f32.mrb[0].mxu0
  %v402 = vadd.f32 %v331, %v401
  %v403 = vpop.f32.mrb[0].mxu0
  %v404 = vpop.f32.mrb[0].mxu0
  %v405 = vadd.f32 %v331, %v404
  %v406 = vpop.f32.mrb[0].mxu0
  %407 = vmatprep.mubr.bf16.mxu0 0
  %408 = vmatmul.mubr.bf16.gmra.mrb[0].mxu0 %v349
  %v409 = vpop.f32.mrb[0].mxu0
  %v410 = vadd.f32 %v331, %v409
  %v411 = vpop.f32.mrb[0].mxu0
  %v412 = vpop.f32.mrb[0].mxu0
  %v413 = vadd.f32 %v331, %v412
  %v414 = vpop.f32.mrb[0].mxu0
  %415 = vdwg.mxu0
  %v420 = vunpack.c.l.b16 %v312
  %v421 = vunpack.c.l.b16 %v313
  %v422 = vunpack.c.l.b16 %v314
  %v423 = vunpack.c.l.b16 %v315
  %v424 = vpack.c.b16 %v421, %v420
  %v425 = vpack.c.b16 %v423, %v422
  %vm428 = vcmask 261120
  %v430 = vsel %vm428, 0, 0
  %432 = vmatprep.subr.bf16.mxu0 0
  %433 = vmatpush1.bf16.msra.mxu0 %v424
  %434 = vmatprep.subr.bf16.mxu0 0
  %435 = vmatpush1.bf16.msra.mxu0 %v425
  %436 = vmatprep.subr.bf16.mxu0 0
  %437 = vmatpush1.bf16.msra.mxu0 0
  %438 = vmatprep.subr.bf16.mxu0 0
  %439 = vmatpush1.bf16.msra.mxu0 0
  %440 = vmatprep.subr.bf16.mxu0 0
  %441 = vmatpush1.bf16.msra.mxu0 0
  %442 = vmatprep.subr.bf16.mxu0 0
  %443 = vmatpush1.bf16.msra.mxu0 0
  %444 = vmatprep.subr.bf16.mxu0 0
  %445 = vmatpush1.bf16.msra.mxu0 0
  %446 = vmatprep.subr.bf16.mxu0 0
  %447 = vmatpush1.bf16.msra.mxu0 0
  %448 = vmatprep.subr.bf16.mxu0 0
  %449 = vmatpush1.bf16.msra.mxu0 0
  %450 = vmatprep.subr.bf16.mxu0 0
  %451 = vmatpush1.bf16.msra.mxu0 0
  %452 = vmatprep.subr.bf16.mxu0 0
  %453 = vmatpush1.bf16.msra.mxu0 0
  %454 = vmatprep.subr.bf16.mxu0 0
  %455 = vmatpush1.bf16.msra.mxu0 0
  %456 = vmatprep.subr.bf16.mxu0 0
  %457 = vmatpush1.bf16.msra.mxu0 0
  %458 = vmatprep.subr.bf16.mxu0 0
  %459 = vmatpush1.bf16.msra.mxu0 0
  %460 = vmatprep.subr.bf16.mxu0 0
  %461 = vmatpush1.bf16.msra.mxu0 0
  %462 = vmatprep.subr.bf16.mxu0 0
  %463 = vmatpush1.bf16.msra.mxu0 0
  %464 = vmatprep.mubr.bf16.mxu0 0
  %465 = vmatmul.mubr.bf16.gmra.mrb[0].mxu0 %v430
  %v466 = vpop.f32.mrb[0].mxu0
  %v467 = vadd.f32 0.0, %v466
  %v468 = vpop.f32.mrb[0].mxu0
  %v469 = vpop.f32.mrb[0].mxu0
  %v470 = vpop.f32.mrb[0].mxu0
  %471 = vdwg.mxu0
  %v472 = vadd.f32 %v386, %v467
  %v473 = vxor.u32 %v472, 2147483648
  %v474 = vmul.f32 %v473, 1.442695
  %v475 = vpow.pop %v474
  %v476 = vadd.f32 %v475, 1.0
  %v477 = vrcp.pop %v476
  %v478 = vmul.f32 1.0, %v477
  %v479 = vtanh.pop %v472
  %v480 = vmul.f32 %v478, 0.0
  %482 = vrot.lane.b32.xlu0 %v479, 64
  %v483 = vpop.permute.xlu0 %482
  %v485 = vmul.f32 %v478, %v483
  %487 = vrot.lane.b32.xlu0 %v485, 32
  %v488 = vpop.permute.xlu0 %487
  %v490 = vadd.f32 %v480, %v488
  %v491 = vtanh.pop %v490
  %493 = vrot.lane.b32.xlu0 %v491, 64
  %v494 = vpop.permute.xlu0 %493
  %v496 = vmul.f32 %v478, %v494
  %498 = vrot.lane.b32.xlu0 %v496, 32
  %v499 = vpop.permute.xlu0 %498
  %501 = vst.msk [vmem:[#allocation2] sm:$0xff] %vm428, %v499
  %v502 = vpack.c.bf16 %v496, %v496
  %504 = vrot.lane.b32.xlu0 %v502, 32
  %v505 = vpop.permute.xlu0 %504
  %v507 = vsel %vm428, %v505, 0
  %509 = vmatprep.subr.bf16.mxu0 0
  %510 = vmatpush1.bf16.msra.mxu0 %v424
  %511 = vmatprep.subr.bf16.mxu0 0
  %512 = vmatpush1.bf16.msra.mxu0 %v425
  %513 = vmatprep.subr.bf16.mxu0 0
  %514 = vmatpush1.bf16.msra.mxu0 0
  %515 = vmatprep.subr.bf16.mxu0 0
  %516 = vmatpush1.bf16.msra.mxu0 0
  %517 = vmatprep.subr.bf16.mxu0 0
  %518 = vmatpush1.bf16.msra.mxu0 0
  %519 = vmatprep.subr.bf16.mxu0 0
  %520 = vmatpush1.bf16.msra.mxu0 0
  %521 = vmatprep.subr.bf16.mxu0 0
  %522 = vmatpush1.bf16.msra.mxu0 0
  %523 = vmatprep.subr.bf16.mxu0 0
  %524 = vmatpush1.bf16.msra.mxu0 0
  %525 = vmatprep.subr.bf16.mxu0 0
  %526 = vmatpush1.bf16.msra.mxu0 0
  %527 = vmatprep.subr.bf16.mxu0 0
  %528 = vmatpush1.bf16.msra.mxu0 0
  %529 = vmatprep.subr.bf16.mxu0 0
  %530 = vmatpush1.bf16.msra.mxu0 0
  %531 = vmatprep.subr.bf16.mxu0 0
  %532 = vmatpush1.bf16.msra.mxu0 0
  %533 = vmatprep.subr.bf16.mxu0 0
  %534 = vmatpush1.bf16.msra.mxu0 0
  %535 = vmatprep.subr.bf16.mxu0 0
  %536 = vmatpush1.bf16.msra.mxu0 0
  %537 = vmatprep.subr.bf16.mxu0 0
  %538 = vmatpush1.bf16.msra.mxu0 0
  %539 = vmatprep.subr.bf16.mxu0 0
  %540 = vmatpush1.bf16.msra.mxu0 0
  %541 = vmatprep.mubr.bf16.mxu0 0
  %542 = vmatmul.mubr.bf16.gmra.mrb[0].mxu0 %v507
  %v543 = vpop.f32.mrb[0].mxu0
  %v544 = vadd.f32 0.0, %v543
  %v545 = vpop.f32.mrb[0].mxu0
  %v546 = vpop.f32.mrb[0].mxu0
  %v547 = vpop.f32.mrb[0].mxu0
  %548 = vdwg.mxu0
  %v549 = vadd.f32 %v389, %v544
  %v550 = vxor.u32 %v549, 2147483648
  %v551 = vmul.f32 %v550, 1.442695
  %v552 = vpow.pop %v551
  %v553 = vadd.f32 %v552, 1.0
  %v554 = vrcp.pop %v553
  %v555 = vmul.f32 1.0, %v554
  %v556 = vtanh.pop %v549
  %v557 = vmul.f32 %v555, %v490
  %559 = vrot.lane.b32.xlu0 %v556, 64
  %v560 = vpop.permute.xlu0 %559
  %v562 = vmul.f32 %v555, %v560
  %564 = vrot.lane.b32.xlu0 %v562, 32
  %v565 = vpop.permute.xlu0 %564
  %v567 = vadd.f32 %v557, %v565
  %v568 = vtanh.pop %v567
  %570 = vrot.lane.b32.xlu0 %v568, 64
  %v571 = vpop.permute.xlu0 %570
  %v573 = vmul.f32 %v555, %v571
  %575 = vrot.lane.b32.xlu0 %v573, 32
  %v576 = vpop.permute.xlu0 %575
  %578 = vst.msk [vmem:[#allocation2 + $0x8] sm:$0xff] %vm428, %v576
  %v579 = vpack.c.bf16 %v573, %v573
  %581 = vrot.lane.b32.xlu0 %v579, 32
  %v582 = vpop.permute.xlu0 %581
  %v584 = vsel %vm428, %v582, 0
  %586 = vmatprep.subr.bf16.mxu0 0
  %587 = vmatpush1.bf16.msra.mxu0 %v424
  %588 = vmatprep.subr.bf16.mxu0 0
  %589 = vmatpush1.bf16.msra.mxu0 %v425
  %590 = vmatprep.subr.bf16.mxu0 0
  %591 = vmatpush1.bf16.msra.mxu0 0
  %592 = vmatprep.subr.bf16.mxu0 0
  %593 = vmatpush1.bf16.msra.mxu0 0
  %594 = vmatprep.subr.bf16.mxu0 0
  %595 = vmatpush1.bf16.msra.mxu0 0
  %596 = vmatprep.subr.bf16.mxu0 0
  %597 = vmatpush1.bf16.msra.mxu0 0
  %598 = vmatprep.subr.bf16.mxu0 0
  %599 = vmatpush1.bf16.msra.mxu0 0
  %600 = vmatprep.subr.bf16.mxu0 0
  %601 = vmatpush1.bf16.msra.mxu0 0
  %602 = vmatprep.subr.bf16.mxu0 0
  %603 = vmatpush1.bf16.msra.mxu0 0
  %604 = vmatprep.subr.bf16.mxu0 0
  %605 = vmatpush1.bf16.msra.mxu0 0
  %606 = vmatprep.subr.bf16.mxu0 0
  %607 = vmatpush1.bf16.msra.mxu0 0
  %608 = vmatprep.subr.bf16.mxu0 0
  %609 = vmatpush1.bf16.msra.mxu0 0
  %610 = vmatprep.subr.bf16.mxu0 0
  %611 = vmatpush1.bf16.msra.mxu0 0
  %612 = vmatprep.subr.bf16.mxu0 0
  %613 = vmatpush1.bf16.msra.mxu0 0
  %614 = vmatprep.subr.bf16.mxu0 0
  %615 = vmatpush1.bf16.msra.mxu0 0
  %616 = vmatprep.subr.bf16.mxu0 0
  %617 = vmatpush1.bf16.msra.mxu0 0
  %618 = vmatprep.mubr.bf16.mxu0 0
  %619 = vmatmul.mubr.bf16.gmra.mrb[0].mxu0 %v584
  %v620 = vpop.f32.mrb[0].mxu0
  %v621 = vadd.f32 0.0, %v620
  %v622 = vpop.f32.mrb[0].mxu0
  %v623 = vpop.f32.mrb[0].mxu0
  %v624 = vpop.f32.mrb[0].mxu0
  %625 = vdwg.mxu0
  %v626 = vadd.f32 %v394, %v621
  %v627 = vxor.u32 %v626, 2147483648
  %v628 = vmul.f32 %v627, 1.442695
  %v629 = vpow.pop %v628
  %v630 = vadd.f32 %v629, 1.0
  %v631 = vrcp.pop %v630
  %v632 = vmul.f32 1.0, %v631
  %v633 = vtanh.pop %v626
  %v634 = vmul.f32 %v632, %v567
  %636 = vrot.lane.b32.xlu0 %v633, 64
  %v637 = vpop.permute.xlu0 %636
  %v639 = vmul.f32 %v632, %v637
  %641 = vrot.lane.b32.xlu0 %v639, 32
  %v642 = vpop.permute.xlu0 %641
  %v644 = vadd.f32 %v634, %v642
  %v645 = vtanh.pop %v644
  %647 = vrot.lane.b32.xlu0 %v645, 64
  %v648 = vpop.permute.xlu0 %647
  %v650 = vmul.f32 %v632, %v648
  %652 = vrot.lane.b32.xlu0 %v650, 32
  %v653 = vpop.permute.xlu0 %652
  %655 = vst.msk [vmem:[#allocation2 + $0x10] sm:$0xff] %vm428, %v653
  %v656 = vpack.c.bf16 %v650, %v650
  %658 = vrot.lane.b32.xlu0 %v656, 32
  %v659 = vpop.permute.xlu0 %658
  %v661 = vsel %vm428, %v659, 0
  %663 = vmatprep.subr.bf16.mxu0 0
  %664 = vmatpush1.bf16.msra.mxu0 %v424
  %665 = vmatprep.subr.bf16.mxu0 0
  %666 = vmatpush1.bf16.msra.mxu0 %v425
  %667 = vmatprep.subr.bf16.mxu0 0
  %668 = vmatpush1.bf16.msra.mxu0 0
  %669 = vmatprep.subr.bf16.mxu0 0
  %670 = vmatpush1.bf16.msra.mxu0 0
  %671 = vmatprep.subr.bf16.mxu0 0
  %672 = vmatpush1.bf16.msra.mxu0 0
  %673 = vmatprep.subr.bf16.mxu0 0
  %674 = vmatpush1.bf16.msra.mxu0 0
  %675 = vmatprep.subr.bf16.mxu0 0
  %676 = vmatpush1.bf16.msra.mxu0 0
  %677 = vmatprep.subr.bf16.mxu0 0
  %678 = vmatpush1.bf16.msra.mxu0 0
  %679 = vmatprep.subr.bf16.mxu0 0
  %680 = vmatpush1.bf16.msra.mxu0 0
  %681 = vmatprep.subr.bf16.mxu0 0
  %682 = vmatpush1.bf16.msra.mxu0 0
  %683 = vmatprep.subr.bf16.mxu0 0
  %684 = vmatpush1.bf16.msra.mxu0 0
  %685 = vmatprep.subr.bf16.mxu0 0
  %686 = vmatpush1.bf16.msra.mxu0 0
  %687 = vmatprep.subr.bf16.mxu0 0
  %688 = vmatpush1.bf16.msra.mxu0 0
  %689 = vmatprep.subr.bf16.mxu0 0
  %690 = vmatpush1.bf16.msra.mxu0 0
  %691 = vmatprep.subr.bf16.mxu0 0
  %692 = vmatpush1.bf16.msra.mxu0 0
  %693 = vmatprep.subr.bf16.mxu0 0
  %694 = vmatpush1.bf16.msra.mxu0 0
  %695 = vmatprep.mubr.bf16.mxu0 0
  %696 = vmatmul.mubr.bf16.gmra.mrb[0].mxu0 %v661
  %v697 = vpop.f32.mrb[0].mxu0
  %v698 = vadd.f32 0.0, %v697
  %v699 = vpop.f32.mrb[0].mxu0
  %v700 = vpop.f32.mrb[0].mxu0
  %v701 = vpop.f32.mrb[0].mxu0
  %702 = vdwg.mxu0
  %v703 = vadd.f32 %v397, %v698
  %v704 = vxor.u32 %v703, 2147483648
  %v705 = vmul.f32 %v704, 1.442695
  %v706 = vpow.pop %v705
  %v707 = vadd.f32 %v706, 1.0
  %v708 = vrcp.pop %v707
  %v709 = vmul.f32 1.0, %v708
  %v710 = vtanh.pop %v703
  %v711 = vmul.f32 %v709, %v644
  %713 = vrot.lane.b32.xlu0 %v710, 64
  %v714 = vpop.permute.xlu0 %713
  %v716 = vmul.f32 %v709, %v714
  %718 = vrot.lane.b32.xlu0 %v716, 32
  %v719 = vpop.permute.xlu0 %718
  %v721 = vadd.f32 %v711, %v719
  %v722 = vtanh.pop %v721
  %724 = vrot.lane.b32.xlu0 %v722, 64
  %v725 = vpop.permute.xlu0 %724
  %v727 = vmul.f32 %v709, %v725
  %729 = vrot.lane.b32.xlu0 %v727, 32
  %v730 = vpop.permute.xlu0 %729
  %732 = vst.msk [vmem:[#allocation2 + $0x18] sm:$0xff] %vm428, %v730
  %v733 = vpack.c.bf16 %v727, %v727
  %735 = vrot.lane.b32.xlu0 %v733, 32
  %v736 = vpop.permute.xlu0 %735
  %v738 = vsel %vm428, %v736, 0
  %740 = vmatprep.subr.bf16.mxu0 0
  %741 = vmatpush1.bf16.msra.mxu0 %v424
  %742 = vmatprep.subr.bf16.mxu0 0
  %743 = vmatpush1.bf16.msra.mxu0 %v425
  %744 = vmatprep.subr.bf16.mxu0 0
  %745 = vmatpush1.bf16.msra.mxu0 0
  %746 = vmatprep.subr.bf16.mxu0 0
  %747 = vmatpush1.bf16.msra.mxu0 0
  %748 = vmatprep.subr.bf16.mxu0 0
  %749 = vmatpush1.bf16.msra.mxu0 0
  %750 = vmatprep.subr.bf16.mxu0 0
  %751 = vmatpush1.bf16.msra.mxu0 0
  %752 = vmatprep.subr.bf16.mxu0 0
  %753 = vmatpush1.bf16.msra.mxu0 0
  %754 = vmatprep.subr.bf16.mxu0 0
  %755 = vmatpush1.bf16.msra.mxu0 0
  %756 = vmatprep.subr.bf16.mxu0 0
  %757 = vmatpush1.bf16.msra.mxu0 0
  %758 = vmatprep.subr.bf16.mxu0 0
  %759 = vmatpush1.bf16.msra.mxu0 0
  %760 = vmatprep.subr.bf16.mxu0 0
  %761 = vmatpush1.bf16.msra.mxu0 0
  %762 = vmatprep.subr.bf16.mxu0 0
  %763 = vmatpush1.bf16.msra.mxu0 0
  %764 = vmatprep.subr.bf16.mxu0 0
  %765 = vmatpush1.bf16.msra.mxu0 0
  %766 = vmatprep.subr.bf16.mxu0 0
  %767 = vmatpush1.bf16.msra.mxu0 0
  %768 = vmatprep.subr.bf16.mxu0 0
  %769 = vmatpush1.bf16.msra.mxu0 0
  %770 = vmatprep.subr.bf16.mxu0 0
  %771 = vmatpush1.bf16.msra.mxu0 0
  %772 = vmatprep.mubr.bf16.mxu0 0
  %773 = vmatmul.mubr.bf16.gmra.mrb[0].mxu0 %v738
  %v774 = vpop.f32.mrb[0].mxu0
  %v775 = vadd.f32 0.0, %v774
  %v776 = vpop.f32.mrb[0].mxu0
  %v777 = vpop.f32.mrb[0].mxu0
  %v778 = vpop.f32.mrb[0].mxu0
  %779 = vdwg.mxu0
  %v780 = vadd.f32 %v402, %v775
  %v781 = vxor.u32 %v780, 2147483648
  %v782 = vmul.f32 %v781, 1.442695
  %v783 = vpow.pop %v782
  %v784 = vadd.f32 %v783, 1.0
  %v785 = vrcp.pop %v784
  %v786 = vmul.f32 1.0, %v785
  %v787 = vtanh.pop %v780
  %v788 = vmul.f32 %v786, %v721
  %790 = vrot.lane.b32.xlu0 %v787, 64
  %v791 = vpop.permute.xlu0 %790
  %v793 = vmul.f32 %v786, %v791
  %795 = vrot.lane.b32.xlu0 %v793, 32
  %v796 = vpop.permute.xlu0 %795
  %v798 = vadd.f32 %v788, %v796
  %v799 = vtanh.pop %v798
  %801 = vrot.lane.b32.xlu0 %v799, 64
  %v802 = vpop.permute.xlu0 %801
  %v804 = vmul.f32 %v786, %v802
  %806 = vrot.lane.b32.xlu0 %v804, 32
  %v807 = vpop.permute.xlu0 %806
  %809 = vst.msk [vmem:[#allocation2 + $0x20] sm:$0xff] %vm428, %v807
  %v810 = vpack.c.bf16 %v804, %v804
  %812 = vrot.lane.b32.xlu0 %v810, 32
  %v813 = vpop.permute.xlu0 %812
  %v815 = vsel %vm428, %v813, 0
  %817 = vmatprep.subr.bf16.mxu0 0
  %818 = vmatpush1.bf16.msra.mxu0 %v424
  %819 = vmatprep.subr.bf16.mxu0 0
  %820 = vmatpush1.bf16.msra.mxu0 %v425
  %821 = vmatprep.subr.bf16.mxu0 0
  %822 = vmatpush1.bf16.msra.mxu0 0
  %823 = vmatprep.subr.bf16.mxu0 0
  %824 = vmatpush1.bf16.msra.mxu0 0
  %825 = vmatprep.subr.bf16.mxu0 0
  %826 = vmatpush1.bf16.msra.mxu0 0
  %827 = vmatprep.subr.bf16.mxu0 0
  %828 = vmatpush1.bf16.msra.mxu0 0
  %829 = vmatprep.subr.bf16.mxu0 0
  %830 = vmatpush1.bf16.msra.mxu0 0
  %831 = vmatprep.subr.bf16.mxu0 0
  %832 = vmatpush1.bf16.msra.mxu0 0
  %833 = vmatprep.subr.bf16.mxu0 0
  %834 = vmatpush1.bf16.msra.mxu0 0
  %835 = vmatprep.subr.bf16.mxu0 0
  %836 = vmatpush1.bf16.msra.mxu0 0
  %837 = vmatprep.subr.bf16.mxu0 0
  %838 = vmatpush1.bf16.msra.mxu0 0
  %839 = vmatprep.subr.bf16.mxu0 0
  %840 = vmatpush1.bf16.msra.mxu0 0
  %841 = vmatprep.subr.bf16.mxu0 0
  %842 = vmatpush1.bf16.msra.mxu0 0
  %843 = vmatprep.subr.bf16.mxu0 0
  %844 = vmatpush1.bf16.msra.mxu0 0
  %845 = vmatprep.subr.bf16.mxu0 0
  %846 = vmatpush1.bf16.msra.mxu0 0
  %847 = vmatprep.subr.bf16.mxu0 0
  %848 = vmatpush1.bf16.msra.mxu0 0
  %849 = vmatprep.mubr.bf16.mxu0 0
  %850 = vmatmul.mubr.bf16.gmra.mrb[0].mxu0 %v815
  %v851 = vpop.f32.mrb[0].mxu0
  %v852 = vadd.f32 0.0, %v851
  %v853 = vpop.f32.mrb[0].mxu0
  %v854 = vpop.f32.mrb[0].mxu0
  %v855 = vpop.f32.mrb[0].mxu0
  %856 = vdwg.mxu0
  %v857 = vadd.f32 %v405, %v852
  %v858 = vxor.u32 %v857, 2147483648
  %v859 = vmul.f32 %v858, 1.442695
  %v860 = vpow.pop %v859
  %v861 = vadd.f32 %v860, 1.0
  %v862 = vrcp.pop %v861
  %v863 = vmul.f32 1.0, %v862
  %v864 = vtanh.pop %v857
  %v865 = vmul.f32 %v863, %v798
  %867 = vrot.lane.b32.xlu0 %v864, 64
  %v868 = vpop.permute.xlu0 %867
  %v870 = vmul.f32 %v863, %v868
  %872 = vrot.lane.b32.xlu0 %v870, 32
  %v873 = vpop.permute.xlu0 %872
  %v875 = vadd.f32 %v865, %v873
  %v876 = vtanh.pop %v875
  %878 = vrot.lane.b32.xlu0 %v876, 64
  %v879 = vpop.permute.xlu0 %878
  %v881 = vmul.f32 %v863, %v879
  %883 = vrot.lane.b32.xlu0 %v881, 32
  %v884 = vpop.permute.xlu0 %883
  %886 = vst.msk [vmem:[#allocation2 + $0x28] sm:$0xff] %vm428, %v884
  %v887 = vpack.c.bf16 %v881, %v881
  %889 = vrot.lane.b32.xlu0 %v887, 32
  %v890 = vpop.permute.xlu0 %889
  %v892 = vsel %vm428, %v890, 0
  %894 = vmatprep.subr.bf16.mxu0 0
  %895 = vmatpush1.bf16.msra.mxu0 %v424
  %896 = vmatprep.subr.bf16.mxu0 0
  %897 = vmatpush1.bf16.msra.mxu0 %v425
  %898 = vmatprep.subr.bf16.mxu0 0
  %899 = vmatpush1.bf16.msra.mxu0 0
  %900 = vmatprep.subr.bf16.mxu0 0
  %901 = vmatpush1.bf16.msra.mxu0 0
  %902 = vmatprep.subr.bf16.mxu0 0
  %903 = vmatpush1.bf16.msra.mxu0 0
  %904 = vmatprep.subr.bf16.mxu0 0
  %905 = vmatpush1.bf16.msra.mxu0 0
  %906 = vmatprep.subr.bf16.mxu0 0
  %907 = vmatpush1.bf16.msra.mxu0 0
  %908 = vmatprep.subr.bf16.mxu0 0
  %909 = vmatpush1.bf16.msra.mxu0 0
  %910 = vmatprep.subr.bf16.mxu0 0
  %911 = vmatpush1.bf16.msra.mxu0 0
  %912 = vmatprep.subr.bf16.mxu0 0
  %913 = vmatpush1.bf16.msra.mxu0 0
  %914 = vmatprep.subr.bf16.mxu0 0
  %915 = vmatpush1.bf16.msra.mxu0 0
  %916 = vmatprep.subr.bf16.mxu0 0
  %917 = vmatpush1.bf16.msra.mxu0 0
  %918 = vmatprep.subr.bf16.mxu0 0
  %919 = vmatpush1.bf16.msra.mxu0 0
  %920 = vmatprep.subr.bf16.mxu0 0
  %921 = vmatpush1.bf16.msra.mxu0 0
  %922 = vmatprep.subr.bf16.mxu0 0
  %923 = vmatpush1.bf16.msra.mxu0 0
  %924 = vmatprep.subr.bf16.mxu0 0
  %925 = vmatpush1.bf16.msra.mxu0 0
  %926 = vmatprep.mubr.bf16.mxu0 0
  %927 = vmatmul.mubr.bf16.gmra.mrb[0].mxu0 %v892
  %v928 = vpop.f32.mrb[0].mxu0
  %v929 = vadd.f32 0.0, %v928
  %v930 = vpop.f32.mrb[0].mxu0
  %v931 = vpop.f32.mrb[0].mxu0
  %v932 = vpop.f32.mrb[0].mxu0
  %933 = vdwg.mxu0
  %v934 = vadd.f32 %v410, %v929
  %v935 = vxor.u32 %v934, 2147483648
  %v936 = vmul.f32 %v935, 1.442695
  %v937 = vpow.pop %v936
  %v938 = vadd.f32 %v937, 1.0
  %v939 = vrcp.pop %v938
  %v940 = vmul.f32 1.0, %v939
  %v941 = vtanh.pop %v934
  %v942 = vmul.f32 %v940, %v875
  %944 = vrot.lane.b32.xlu0 %v941, 64
  %v945 = vpop.permute.xlu0 %944
  %v947 = vmul.f32 %v940, %v945
  %949 = vrot.lane.b32.xlu0 %v947, 32
  %v950 = vpop.permute.xlu0 %949
  %v952 = vadd.f32 %v942, %v950
  %v953 = vtanh.pop %v952
  %955 = vrot.lane.b32.xlu0 %v953, 64
  %v956 = vpop.permute.xlu0 %955
  %v958 = vmul.f32 %v940, %v956
  %960 = vrot.lane.b32.xlu0 %v958, 32
  %v961 = vpop.permute.xlu0 %960
  %963 = vst.msk [vmem:[#allocation2 + $0x30] sm:$0xff] %vm428, %v961
  %v964 = vpack.c.bf16 %v958, %v958
  %966 = vrot.lane.b32.xlu0 %v964, 32
  %v967 = vpop.permute.xlu0 %966
  %v969 = vsel %vm428, %v967, 0
  %971 = vmatprep.subr.bf16.mxu0 0
  %972 = vmatpush1.bf16.msra.mxu0 %v424
  %973 = vmatprep.subr.bf16.mxu0 0
  %974 = vmatpush1.bf16.msra.mxu0 %v425
  %975 = vmatprep.subr.bf16.mxu0 0
  %976 = vmatpush1.bf16.msra.mxu0 0
  %977 = vmatprep.subr.bf16.mxu0 0
  %978 = vmatpush1.bf16.msra.mxu0 0
  %979 = vmatprep.subr.bf16.mxu0 0
  %980 = vmatpush1.bf16.msra.mxu0 0
  %981 = vmatprep.subr.bf16.mxu0 0
  %982 = vmatpush1.bf16.msra.mxu0 0
  %983 = vmatprep.subr.bf16.mxu0 0
  %984 = vmatpush1.bf16.msra.mxu0 0
  %985 = vmatprep.subr.bf16.mxu0 0
  %986 = vmatpush1.bf16.msra.mxu0 0
  %987 = vmatprep.subr.bf16.mxu0 0
  %988 = vmatpush1.bf16.msra.mxu0 0
  %989 = vmatprep.subr.bf16.mxu0 0
  %990 = vmatpush1.bf16.msra.mxu0 0
  %991 = vmatprep.subr.bf16.mxu0 0
  %992 = vmatpush1.bf16.msra.mxu0 0
  %993 = vmatprep.subr.bf16.mxu0 0
  %994 = vmatpush1.bf16.msra.mxu0 0
  %995 = vmatprep.subr.bf16.mxu0 0
  %996 = vmatpush1.bf16.msra.mxu0 0
  %997 = vmatprep.subr.bf16.mxu0 0
  %998 = vmatpush1.bf16.msra.mxu0 0
  %999 = vmatprep.subr.bf16.mxu0 0
  %1000 = vmatpush1.bf16.msra.mxu0 0
  %1001 = vmatprep.subr.bf16.mxu0 0
  %1002 = vmatpush1.bf16.msra.mxu0 0
  %1003 = vmatprep.mubr.bf16.mxu0 0
  %1004 = vmatmul.mubr.bf16.gmra.mrb[0].mxu0 %v969
  %v1005 = vpop.f32.mrb[0].mxu0
  %v1006 = vadd.f32 0.0, %v1005
  %v1007 = vpop.f32.mrb[0].mxu0
  %v1008 = vpop.f32.mrb[0].mxu0
  %v1009 = vpop.f32.mrb[0].mxu0
  %1010 = vdwg.mxu0
  %v1011 = vadd.f32 %v413, %v1006
  %v1012 = vxor.u32 %v1011, 2147483648
  %v1013 = vmul.f32 %v1012, 1.442695
  %v1014 = vpow.pop %v1013
  %v1015 = vadd.f32 %v1014, 1.0
  %v1016 = vrcp.pop %v1015
  %v1017 = vmul.f32 1.0, %v1016
  %v1018 = vtanh.pop %v1011
  %v1019 = vmul.f32 %v1017, %v952
  %1021 = vrot.lane.b32.xlu0 %v1018, 64
  %v1022 = vpop.permute.xlu0 %1021
  %v1024 = vmul.f32 %v1017, %v1022
  %1026 = vrot.lane.b32.xlu0 %v1024, 32
  %v1027 = vpop.permute.xlu0 %1026
  %v1029 = vadd.f32 %v1019, %v1027
  %v1030 = vtanh.pop %v1029
  %1032 = vrot.lane.b32.xlu0 %v1030, 64
  %v1033 = vpop.permute.xlu0 %1032
  %v1035 = vmul.f32 %v1017, %v1033
  %1037 = vrot.lane.b32.xlu0 %v1035, 32
  %v1038 = vpop.permute.xlu0 %1037
  %1040 = vst.msk [vmem:[#allocation2 + $0x38] sm:$0xff] %vm428, %v1038
  %v1041 = vld [vmem:[#allocation2] sm:$0xff]
  %v1042 = vld [vmem:[#allocation2 + $0x8] sm:$0xff]
  %v1043 = vld [vmem:[#allocation2 + $0x10] sm:$0xff]
  %v1044 = vld [vmem:[#allocation2 + $0x18] sm:$0xff]
  %v1045 = vld [vmem:[#allocation2 + $0x20] sm:$0xff]
  %v1046 = vld [vmem:[#allocation2 + $0x28] sm:$0xff]
  %v1047 = vld [vmem:[#allocation2 + $0x30] sm:$0xff]
  %v1048 = vld [vmem:[#allocation2 + $0x38] sm:$0xff]
  %v1049 = vpack.c.bf16 %v1042, %v1041
  %v1050 = vpack.c.bf16 %v1044, %v1043
  %v1051 = vpack.c.bf16 %v1046, %v1045
  %v1052 = vpack.c.bf16 %v1048, %v1047
  %v1053 = vlaneseq
  %v1054 = vshrl.u32 %v1053, 7
  %v1055 = vsub.s32 0, %v1054
  %v1056 = vrot.slane %v23, %v1055
  %v1061 = vunpack.c.l.b16 %v316
  %v1062 = vunpack.c.l.b16 %v317
  %v1063 = vunpack.c.l.b16 %v318
  %v1064 = vunpack.c.l.b16 %v319
  %v1065 = vpack.c.b16 %v1062, %v1061
  %v1066 = vpack.c.b16 %v1064, %v1063
  %v1070 = vsel %vm428, %v1049, 0
  %v1073 = vsel %vm428, %v1050, 0
  %v1076 = vsel %vm428, %v1051, 0
  %v1079 = vsel %vm428, %v1052, 0
  %1081 = vmatprep.subr.bf16.mxu0 0
  %1082 = vmatpush1.bf16.msra.mxu0 %v1065
  %1083 = vmatprep.subr.bf16.mxu0 0
  %1084 = vmatpush1.bf16.msra.mxu0 %v1066
  %1085 = vmatprep.subr.bf16.mxu0 0
  %1086 = vmatpush1.bf16.msra.mxu0 0
  %1087 = vmatprep.subr.bf16.mxu0 0
  %1088 = vmatpush1.bf16.msra.mxu0 0
  %1089 = vmatprep.subr.bf16.mxu0 0
  %1090 = vmatpush1.bf16.msra.mxu0 0
  %1091 = vmatprep.subr.bf16.mxu0 0
  %1092 = vmatpush1.bf16.msra.mxu0 0
  %1093 = vmatprep.subr.bf16.mxu0 0
  %1094 = vmatpush1.bf16.msra.mxu0 0
  %1095 = vmatprep.subr.bf16.mxu0 0
  %1096 = vmatpush1.bf16.msra.mxu0 0
  %1097 = vmatprep.subr.bf16.mxu0 0
  %1098 = vmatpush1.bf16.msra.mxu0 0
  %1099 = vmatprep.subr.bf16.mxu0 0
  %1100 = vmatpush1.bf16.msra.mxu0 0
  %1101 = vmatprep.subr.bf16.mxu0 0
  %1102 = vmatpush1.bf16.msra.mxu0 0
  %1103 = vmatprep.subr.bf16.mxu0 0
  %1104 = vmatpush1.bf16.msra.mxu0 0
  %1105 = vmatprep.subr.bf16.mxu0 0
  %1106 = vmatpush1.bf16.msra.mxu0 0
  %1107 = vmatprep.subr.bf16.mxu0 0
  %1108 = vmatpush1.bf16.msra.mxu0 0
  %1109 = vmatprep.subr.bf16.mxu0 0
  %1110 = vmatpush1.bf16.msra.mxu0 0
  %1111 = vmatprep.subr.bf16.mxu0 0
  %1112 = vmatpush1.bf16.msra.mxu0 0
  %1113 = vmatprep.mubr.bf16.mxu0 0
  %1114 = vmatmul.mubr.bf16.gmra.mrb[0].mxu0 %v1070
  %v1115 = vpop.f32.mrb[0].mxu0
  %v1116 = vadd.f32 %v1056, %v1115
  %v1117 = vpop.f32.mrb[0].mxu0
  %v1118 = vpop.f32.mrb[0].mxu0
  %v1119 = vadd.f32 %v1056, %v1118
  %v1120 = vpop.f32.mrb[0].mxu0
  %1121 = vmatprep.mubr.bf16.mxu0 0
  %1122 = vmatmul.mubr.bf16.gmra.mrb[0].mxu0 %v1073
  %v1123 = vpop.f32.mrb[0].mxu0
  %v1124 = vadd.f32 %v1056, %v1123
  %v1125 = vpop.f32.mrb[0].mxu0
  %v1126 = vpop.f32.mrb[0].mxu0
  %v1127 = vadd.f32 %v1056, %v1126
  %v1128 = vpop.f32.mrb[0].mxu0
  %1129 = vmatprep.mubr.bf16.mxu0 0
  %1130 = vmatmul.mubr.bf16.gmra.mrb[0].mxu0 %v1076
  %v1131 = vpop.f32.mrb[0].mxu0
  %v1132 = vadd.f32 %v1056, %v1131
  %v1133 = vpop.f32.mrb[0].mxu0
  %v1134 = vpop.f32.mrb[0].mxu0
  %v1135 = vadd.f32 %v1056, %v1134
  %v1136 = vpop.f32.mrb[0].mxu0
  %1137 = vmatprep.mubr.bf16.mxu0 0
  %1138 = vmatmul.mubr.bf16.gmra.mrb[0].mxu0 %v1079
  %v1139 = vpop.f32.mrb[0].mxu0
  %v1140 = vadd.f32 %v1056, %v1139
  %v1141 = vpop.f32.mrb[0].mxu0
  %v1142 = vpop.f32.mrb[0].mxu0
  %v1143 = vadd.f32 %v1056, %v1142
  %v1144 = vpop.f32.mrb[0].mxu0
  %1145 = vdwg.mxu0
  %v1150 = vunpack.c.l.b16 %v320
  %v1151 = vunpack.c.l.b16 %v321
  %v1152 = vunpack.c.l.b16 %v322
  %v1153 = vunpack.c.l.b16 %v323
  %v1154 = vpack.c.b16 %v1151, %v1150
  %v1155 = vpack.c.b16 %v1153, %v1152
  %1158 = vmatprep.subr.bf16.mxu0 0
  %1159 = vmatpush1.bf16.msra.mxu0 %v1154
  %1160 = vmatprep.subr.bf16.mxu0 0
  %1161 = vmatpush1.bf16.msra.mxu0 %v1155
  %1162 = vmatprep.subr.bf16.mxu0 0
  %1163 = vmatpush1.bf16.msra.mxu0 0
  %1164 = vmatprep.subr.bf16.mxu0 0
  %1165 = vmatpush1.bf16.msra.mxu0 0
  %1166 = vmatprep.subr.bf16.mxu0 0
  %1167 = vmatpush1.bf16.msra.mxu0 0
  %1168 = vmatprep.subr.bf16.mxu0 0
  %1169 = vmatpush1.bf16.msra.mxu0 0
  %1170 = vmatprep.subr.bf16.mxu0 0
  %1171 = vmatpush1.bf16.msra.mxu0 0
  %1172 = vmatprep.subr.bf16.mxu0 0
  %1173 = vmatpush1.bf16.msra.mxu0 0
  %1174 = vmatprep.subr.bf16.mxu0 0
  %1175 = vmatpush1.bf16.msra.mxu0 0
  %1176 = vmatprep.subr.bf16.mxu0 0
  %1177 = vmatpush1.bf16.msra.mxu0 0
  %1178 = vmatprep.subr.bf16.mxu0 0
  %1179 = vmatpush1.bf16.msra.mxu0 0
  %1180 = vmatprep.subr.bf16.mxu0 0
  %1181 = vmatpush1.bf16.msra.mxu0 0
  %1182 = vmatprep.subr.bf16.mxu0 0
  %1183 = vmatpush1.bf16.msra.mxu0 0
  %1184 = vmatprep.subr.bf16.mxu0 0
  %1185 = vmatpush1.bf16.msra.mxu0 0
  %1186 = vmatprep.subr.bf16.mxu0 0
  %1187 = vmatpush1.bf16.msra.mxu0 0
  %1188 = vmatprep.subr.bf16.mxu0 0
  %1189 = vmatpush1.bf16.msra.mxu0 0
  %1190 = vmatprep.mubr.bf16.mxu0 0
  %1191 = vmatmul.mubr.bf16.gmra.mrb[0].mxu0 %v430
  %v1192 = vpop.f32.mrb[0].mxu0
  %v1193 = vadd.f32 0.0, %v1192
  %v1194 = vpop.f32.mrb[0].mxu0
  %v1195 = vpop.f32.mrb[0].mxu0
  %v1196 = vpop.f32.mrb[0].mxu0
  %1197 = vdwg.mxu0
  %v1198 = vadd.f32 %v1116, %v1193
  %v1199 = vxor.u32 %v1198, 2147483648
  %v1200 = vmul.f32 %v1199, 1.442695
  %v1201 = vpow.pop %v1200
  %v1202 = vadd.f32 %v1201, 1.0
  %v1203 = vrcp.pop %v1202
  %v1204 = vmul.f32 1.0, %v1203
  %v1205 = vtanh.pop %v1198
  %v1206 = vmul.f32 %v1204, 0.0
  %1208 = vrot.lane.b32.xlu0 %v1205, 64
  %v1209 = vpop.permute.xlu0 %1208
  %v1211 = vmul.f32 %v1204, %v1209
  %1213 = vrot.lane.b32.xlu0 %v1211, 32
  %v1214 = vpop.permute.xlu0 %1213
  %v1216 = vadd.f32 %v1206, %v1214
  %v1217 = vtanh.pop %v1216
  %1219 = vrot.lane.b32.xlu0 %v1217, 64
  %v1220 = vpop.permute.xlu0 %1219
  %v1222 = vmul.f32 %v1204, %v1220
  %v1223 = vpack.c.bf16 %v1222, %v1222
  %1225 = vrot.lane.b32.xlu0 %v1223, 32
  %v1226 = vpop.permute.xlu0 %1225
  %v1228 = vsel %vm428, %v1226, 0
  %1230 = vmatprep.subr.bf16.mxu0 0
  %1231 = vmatpush1.bf16.msra.mxu0 %v1154
  %1232 = vmatprep.subr.bf16.mxu0 0
  %1233 = vmatpush1.bf16.msra.mxu0 %v1155
  %1234 = vmatprep.subr.bf16.mxu0 0
  %1235 = vmatpush1.bf16.msra.mxu0 0
  %1236 = vmatprep.subr.bf16.mxu0 0
  %1237 = vmatpush1.bf16.msra.mxu0 0
  %1238 = vmatprep.subr.bf16.mxu0 0
  %1239 = vmatpush1.bf16.msra.mxu0 0
  %1240 = vmatprep.subr.bf16.mxu0 0
  %1241 = vmatpush1.bf16.msra.mxu0 0
  %1242 = vmatprep.subr.bf16.mxu0 0
  %1243 = vmatpush1.bf16.msra.mxu0 0
  %1244 = vmatprep.subr.bf16.mxu0 0
  %1245 = vmatpush1.bf16.msra.mxu0 0
  %1246 = vmatprep.subr.bf16.mxu0 0
  %1247 = vmatpush1.bf16.msra.mxu0 0
  %1248 = vmatprep.subr.bf16.mxu0 0
  %1249 = vmatpush1.bf16.msra.mxu0 0
  %1250 = vmatprep.subr.bf16.mxu0 0
  %1251 = vmatpush1.bf16.msra.mxu0 0
  %1252 = vmatprep.subr.bf16.mxu0 0
  %1253 = vmatpush1.bf16.msra.mxu0 0
  %1254 = vmatprep.subr.bf16.mxu0 0
  %1255 = vmatpush1.bf16.msra.mxu0 0
  %1256 = vmatprep.subr.bf16.mxu0 0
  %1257 = vmatpush1.bf16.msra.mxu0 0
  %1258 = vmatprep.subr.bf16.mxu0 0
  %1259 = vmatpush1.bf16.msra.mxu0 0
  %1260 = vmatprep.subr.bf16.mxu0 0
  %1261 = vmatpush1.bf16.msra.mxu0 0
  %1262 = vmatprep.mubr.bf16.mxu0 0
  %1263 = vmatmul.mubr.bf16.gmra.mrb[0].mxu0 %v1228
  %v1264 = vpop.f32.mrb[0].mxu0
  %v1265 = vadd.f32 0.0, %v1264
  %v1266 = vpop.f32.mrb[0].mxu0
  %v1267 = vpop.f32.mrb[0].mxu0
  %v1268 = vpop.f32.mrb[0].mxu0
  %1269 = vdwg.mxu0
  %v1270 = vadd.f32 %v1119, %v1265
  %v1271 = vxor.u32 %v1270, 2147483648
  %v1272 = vmul.f32 %v1271, 1.442695
  %v1273 = vpow.pop %v1272
  %v1274 = vadd.f32 %v1273, 1.0
  %v1275 = vrcp.pop %v1274
  %v1276 = vmul.f32 1.0, %v1275
  %v1277 = vtanh.pop %v1270
  %v1278 = vmul.f32 %v1276, %v1216
  %1280 = vrot.lane.b32.xlu0 %v1277, 64
  %v1281 = vpop.permute.xlu0 %1280
  %v1283 = vmul.f32 %v1276, %v1281
  %1285 = vrot.lane.b32.xlu0 %v1283, 32
  %v1286 = vpop.permute.xlu0 %1285
  %v1288 = vadd.f32 %v1278, %v1286
  %v1289 = vtanh.pop %v1288
  %1291 = vrot.lane.b32.xlu0 %v1289, 64
  %v1292 = vpop.permute.xlu0 %1291
  %v1294 = vmul.f32 %v1276, %v1292
  %v1295 = vpack.c.bf16 %v1294, %v1294
  %1297 = vrot.lane.b32.xlu0 %v1295, 32
  %v1298 = vpop.permute.xlu0 %1297
  %v1300 = vsel %vm428, %v1298, 0
  %1302 = vmatprep.subr.bf16.mxu0 0
  %1303 = vmatpush1.bf16.msra.mxu0 %v1154
  %1304 = vmatprep.subr.bf16.mxu0 0
  %1305 = vmatpush1.bf16.msra.mxu0 %v1155
  %1306 = vmatprep.subr.bf16.mxu0 0
  %1307 = vmatpush1.bf16.msra.mxu0 0
  %1308 = vmatprep.subr.bf16.mxu0 0
  %1309 = vmatpush1.bf16.msra.mxu0 0
  %1310 = vmatprep.subr.bf16.mxu0 0
  %1311 = vmatpush1.bf16.msra.mxu0 0
  %1312 = vmatprep.subr.bf16.mxu0 0
  %1313 = vmatpush1.bf16.msra.mxu0 0
  %1314 = vmatprep.subr.bf16.mxu0 0
  %1315 = vmatpush1.bf16.msra.mxu0 0
  %1316 = vmatprep.subr.bf16.mxu0 0
  %1317 = vmatpush1.bf16.msra.mxu0 0
  %1318 = vmatprep.subr.bf16.mxu0 0
  %1319 = vmatpush1.bf16.msra.mxu0 0
  %1320 = vmatprep.subr.bf16.mxu0 0
  %1321 = vmatpush1.bf16.msra.mxu0 0
  %1322 = vmatprep.subr.bf16.mxu0 0
  %1323 = vmatpush1.bf16.msra.mxu0 0
  %1324 = vmatprep.subr.bf16.mxu0 0
  %1325 = vmatpush1.bf16.msra.mxu0 0
  %1326 = vmatprep.subr.bf16.mxu0 0
  %1327 = vmatpush1.bf16.msra.mxu0 0
  %1328 = vmatprep.subr.bf16.mxu0 0
  %1329 = vmatpush1.bf16.msra.mxu0 0
  %1330 = vmatprep.subr.bf16.mxu0 0
  %1331 = vmatpush1.bf16.msra.mxu0 0
  %1332 = vmatprep.subr.bf16.mxu0 0
  %1333 = vmatpush1.bf16.msra.mxu0 0
  %1334 = vmatprep.mubr.bf16.mxu0 0
  %1335 = vmatmul.mubr.bf16.gmra.mrb[0].mxu0 %v1300
  %v1336 = vpop.f32.mrb[0].mxu0
  %v1337 = vadd.f32 0.0, %v1336
  %v1338 = vpop.f32.mrb[0].mxu0
  %v1339 = vpop.f32.mrb[0].mxu0
  %v1340 = vpop.f32.mrb[0].mxu0
  %1341 = vdwg.mxu0
  %v1342 = vadd.f32 %v1124, %v1337
  %v1343 = vxor.u32 %v1342, 2147483648
  %v1344 = vmul.f32 %v1343, 1.442695
  %v1345 = vpow.pop %v1344
  %v1346 = vadd.f32 %v1345, 1.0
  %v1347 = vrcp.pop %v1346
  %v1348 = vmul.f32 1.0, %v1347
  %v1349 = vtanh.pop %v1342
  %v1350 = vmul.f32 %v1348, %v1288
  %1352 = vrot.lane.b32.xlu0 %v1349, 64
  %v1353 = vpop.permute.xlu0 %1352
  %v1355 = vmul.f32 %v1348, %v1353
  %1357 = vrot.lane.b32.xlu0 %v1355, 32
  %v1358 = vpop.permute.xlu0 %1357
  %v1360 = vadd.f32 %v1350, %v1358
  %v1361 = vtanh.pop %v1360
  %1363 = vrot.lane.b32.xlu0 %v1361, 64
  %v1364 = vpop.permute.xlu0 %1363
  %v1366 = vmul.f32 %v1348, %v1364
  %v1367 = vpack.c.bf16 %v1366, %v1366
  %1369 = vrot.lane.b32.xlu0 %v1367, 32
  %v1370 = vpop.permute.xlu0 %1369
  %v1372 = vsel %vm428, %v1370, 0
  %1374 = vmatprep.subr.bf16.mxu0 0
  %1375 = vmatpush1.bf16.msra.mxu0 %v1154
  %1376 = vmatprep.subr.bf16.mxu0 0
  %1377 = vmatpush1.bf16.msra.mxu0 %v1155
  %1378 = vmatprep.subr.bf16.mxu0 0
  %1379 = vmatpush1.bf16.msra.mxu0 0
  %1380 = vmatprep.subr.bf16.mxu0 0
  %1381 = vmatpush1.bf16.msra.mxu0 0
  %1382 = vmatprep.subr.bf16.mxu0 0
  %1383 = vmatpush1.bf16.msra.mxu0 0
  %1384 = vmatprep.subr.bf16.mxu0 0
  %1385 = vmatpush1.bf16.msra.mxu0 0
  %1386 = vmatprep.subr.bf16.mxu0 0
  %1387 = vmatpush1.bf16.msra.mxu0 0
  %1388 = vmatprep.subr.bf16.mxu0 0
  %1389 = vmatpush1.bf16.msra.mxu0 0
  %1390 = vmatprep.subr.bf16.mxu0 0
  %1391 = vmatpush1.bf16.msra.mxu0 0
  %1392 = vmatprep.subr.bf16.mxu0 0
  %1393 = vmatpush1.bf16.msra.mxu0 0
  %1394 = vmatprep.subr.bf16.mxu0 0
  %1395 = vmatpush1.bf16.msra.mxu0 0
  %1396 = vmatprep.subr.bf16.mxu0 0
  %1397 = vmatpush1.bf16.msra.mxu0 0
  %1398 = vmatprep.subr.bf16.mxu0 0
  %1399 = vmatpush1.bf16.msra.mxu0 0
  %1400 = vmatprep.subr.bf16.mxu0 0
  %1401 = vmatpush1.bf16.msra.mxu0 0
  %1402 = vmatprep.subr.bf16.mxu0 0
  %1403 = vmatpush1.bf16.msra.mxu0 0
  %1404 = vmatprep.subr.bf16.mxu0 0
  %1405 = vmatpush1.bf16.msra.mxu0 0
  %1406 = vmatprep.mubr.bf16.mxu0 0
  %1407 = vmatmul.mubr.bf16.gmra.mrb[0].mxu0 %v1372
  %v1408 = vpop.f32.mrb[0].mxu0
  %v1409 = vadd.f32 0.0, %v1408
  %v1410 = vpop.f32.mrb[0].mxu0
  %v1411 = vpop.f32.mrb[0].mxu0
  %v1412 = vpop.f32.mrb[0].mxu0
  %1413 = vdwg.mxu0
  %v1414 = vadd.f32 %v1127, %v1409
  %v1415 = vxor.u32 %v1414, 2147483648
  %v1416 = vmul.f32 %v1415, 1.442695
  %v1417 = vpow.pop %v1416
  %v1418 = vadd.f32 %v1417, 1.0
  %v1419 = vrcp.pop %v1418
  %v1420 = vmul.f32 1.0, %v1419
  %v1421 = vtanh.pop %v1414
  %v1422 = vmul.f32 %v1420, %v1360
  %1424 = vrot.lane.b32.xlu0 %v1421, 64
  %v1425 = vpop.permute.xlu0 %1424
  %v1427 = vmul.f32 %v1420, %v1425
  %1429 = vrot.lane.b32.xlu0 %v1427, 32
  %v1430 = vpop.permute.xlu0 %1429
  %v1432 = vadd.f32 %v1422, %v1430
  %v1433 = vtanh.pop %v1432
  %1435 = vrot.lane.b32.xlu0 %v1433, 64
  %v1436 = vpop.permute.xlu0 %1435
  %v1438 = vmul.f32 %v1420, %v1436
  %v1439 = vpack.c.bf16 %v1438, %v1438
  %1441 = vrot.lane.b32.xlu0 %v1439, 32
  %v1442 = vpop.permute.xlu0 %1441
  %v1444 = vsel %vm428, %v1442, 0
  %1446 = vmatprep.subr.bf16.mxu0 0
  %1447 = vmatpush1.bf16.msra.mxu0 %v1154
  %1448 = vmatprep.subr.bf16.mxu0 0
  %1449 = vmatpush1.bf16.msra.mxu0 %v1155
  %1450 = vmatprep.subr.bf16.mxu0 0
  %1451 = vmatpush1.bf16.msra.mxu0 0
  %1452 = vmatprep.subr.bf16.mxu0 0
  %1453 = vmatpush1.bf16.msra.mxu0 0
  %1454 = vmatprep.subr.bf16.mxu0 0
  %1455 = vmatpush1.bf16.msra.mxu0 0
  %1456 = vmatprep.subr.bf16.mxu0 0
  %1457 = vmatpush1.bf16.msra.mxu0 0
  %1458 = vmatprep.subr.bf16.mxu0 0
  %1459 = vmatpush1.bf16.msra.mxu0 0
  %1460 = vmatprep.subr.bf16.mxu0 0
  %1461 = vmatpush1.bf16.msra.mxu0 0
  %1462 = vmatprep.subr.bf16.mxu0 0
  %1463 = vmatpush1.bf16.msra.mxu0 0
  %1464 = vmatprep.subr.bf16.mxu0 0
  %1465 = vmatpush1.bf16.msra.mxu0 0
  %1466 = vmatprep.subr.bf16.mxu0 0
  %1467 = vmatpush1.bf16.msra.mxu0 0
  %1468 = vmatprep.subr.bf16.mxu0 0
  %1469 = vmatpush1.bf16.msra.mxu0 0
  %1470 = vmatprep.subr.bf16.mxu0 0
  %1471 = vmatpush1.bf16.msra.mxu0 0
  %1472 = vmatprep.subr.bf16.mxu0 0
  %1473 = vmatpush1.bf16.msra.mxu0 0
  %1474 = vmatprep.subr.bf16.mxu0 0
  %1475 = vmatpush1.bf16.msra.mxu0 0
  %1476 = vmatprep.subr.bf16.mxu0 0
  %1477 = vmatpush1.bf16.msra.mxu0 0
  %1478 = vmatprep.mubr.bf16.mxu0 0
  %1479 = vmatmul.mubr.bf16.gmra.mrb[0].mxu0 %v1444
  %v1480 = vpop.f32.mrb[0].mxu0
  %v1481 = vadd.f32 0.0, %v1480
  %v1482 = vpop.f32.mrb[0].mxu0
  %v1483 = vpop.f32.mrb[0].mxu0
  %v1484 = vpop.f32.mrb[0].mxu0
  %1485 = vdwg.mxu0
  %v1486 = vadd.f32 %v1132, %v1481
  %v1487 = vxor.u32 %v1486, 2147483648
  %v1488 = vmul.f32 %v1487, 1.442695
  %v1489 = vpow.pop %v1488
  %v1490 = vadd.f32 %v1489, 1.0
  %v1491 = vrcp.pop %v1490
  %v1492 = vmul.f32 1.0, %v1491
  %v1493 = vtanh.pop %v1486
  %v1494 = vmul.f32 %v1492, %v1432
  %1496 = vrot.lane.b32.xlu0 %v1493, 64
  %v1497 = vpop.permute.xlu0 %1496
  %v1499 = vmul.f32 %v1492, %v1497
  %1501 = vrot.lane.b32.xlu0 %v1499, 32
  %v1502 = vpop.permute.xlu0 %1501
  %v1504 = vadd.f32 %v1494, %v1502
  %v1505 = vtanh.pop %v1504
  %1507 = vrot.lane.b32.xlu0 %v1505, 64
  %v1508 = vpop.permute.xlu0 %1507
  %v1510 = vmul.f32 %v1492, %v1508
  %v1511 = vpack.c.bf16 %v1510, %v1510
  %1513 = vrot.lane.b32.xlu0 %v1511, 32
  %v1514 = vpop.permute.xlu0 %1513
  %v1516 = vsel %vm428, %v1514, 0
  %1518 = vmatprep.subr.bf16.mxu0 0
  %1519 = vmatpush1.bf16.msra.mxu0 %v1154
  %1520 = vmatprep.subr.bf16.mxu0 0
  %1521 = vmatpush1.bf16.msra.mxu0 %v1155
  %1522 = vmatprep.subr.bf16.mxu0 0
  %1523 = vmatpush1.bf16.msra.mxu0 0
  %1524 = vmatprep.subr.bf16.mxu0 0
  %1525 = vmatpush1.bf16.msra.mxu0 0
  %1526 = vmatprep.subr.bf16.mxu0 0
  %1527 = vmatpush1.bf16.msra.mxu0 0
  %1528 = vmatprep.subr.bf16.mxu0 0
  %1529 = vmatpush1.bf16.msra.mxu0 0
  %1530 = vmatprep.subr.bf16.mxu0 0
  %1531 = vmatpush1.bf16.msra.mxu0 0
  %1532 = vmatprep.subr.bf16.mxu0 0
  %1533 = vmatpush1.bf16.msra.mxu0 0
  %1534 = vmatprep.subr.bf16.mxu0 0
  %1535 = vmatpush1.bf16.msra.mxu0 0
  %1536 = vmatprep.subr.bf16.mxu0 0
  %1537 = vmatpush1.bf16.msra.mxu0 0
  %1538 = vmatprep.subr.bf16.mxu0 0
  %1539 = vmatpush1.bf16.msra.mxu0 0
  %1540 = vmatprep.subr.bf16.mxu0 0
  %1541 = vmatpush1.bf16.msra.mxu0 0
  %1542 = vmatprep.subr.bf16.mxu0 0
  %1543 = vmatpush1.bf16.msra.mxu0 0
  %1544 = vmatprep.subr.bf16.mxu0 0
  %1545 = vmatpush1.bf16.msra.mxu0 0
  %1546 = vmatprep.subr.bf16.mxu0 0
  %1547 = vmatpush1.bf16.msra.mxu0 0
  %1548 = vmatprep.subr.bf16.mxu0 0
  %1549 = vmatpush1.bf16.msra.mxu0 0
  %1550 = vmatprep.mubr.bf16.mxu0 0
  %1551 = vmatmul.mubr.bf16.gmra.mrb[0].mxu0 %v1516
  %v1552 = vpop.f32.mrb[0].mxu0
  %v1553 = vadd.f32 0.0, %v1552
  %v1554 = vpop.f32.mrb[0].mxu0
  %v1555 = vpop.f32.mrb[0].mxu0
  %v1556 = vpop.f32.mrb[0].mxu0
  %1557 = vdwg.mxu0
  %v1558 = vadd.f32 %v1135, %v1553
  %v1559 = vxor.u32 %v1558, 2147483648
  %v1560 = vmul.f32 %v1559, 1.442695
  %v1561 = vpow.pop %v1560
  %v1562 = vadd.f32 %v1561, 1.0
  %v1563 = vrcp.pop %v1562
  %v1564 = vmul.f32 1.0, %v1563
  %v1565 = vtanh.pop %v1558
  %v1566 = vmul.f32 %v1564, %v1504
  %1568 = vrot.lane.b32.xlu0 %v1565, 64
  %v1569 = vpop.permute.xlu0 %1568
  %v1571 = vmul.f32 %v1564, %v1569
  %1573 = vrot.lane.b32.xlu0 %v1571, 32
  %v1574 = vpop.permute.xlu0 %1573
  %v1576 = vadd.f32 %v1566, %v1574
  %v1577 = vtanh.pop %v1576
  %1579 = vrot.lane.b32.xlu0 %v1577, 64
  %v1580 = vpop.permute.xlu0 %1579
  %v1582 = vmul.f32 %v1564, %v1580
  %v1583 = vpack.c.bf16 %v1582, %v1582
  %1585 = vrot.lane.b32.xlu0 %v1583, 32
  %v1586 = vpop.permute.xlu0 %1585
  %v1588 = vsel %vm428, %v1586, 0
  %1590 = vmatprep.subr.bf16.mxu0 0
  %1591 = vmatpush1.bf16.msra.mxu0 %v1154
  %1592 = vmatprep.subr.bf16.mxu0 0
  %1593 = vmatpush1.bf16.msra.mxu0 %v1155
  %1594 = vmatprep.subr.bf16.mxu0 0
  %1595 = vmatpush1.bf16.msra.mxu0 0
  %1596 = vmatprep.subr.bf16.mxu0 0
  %1597 = vmatpush1.bf16.msra.mxu0 0
  %1598 = vmatprep.subr.bf16.mxu0 0
  %1599 = vmatpush1.bf16.msra.mxu0 0
  %1600 = vmatprep.subr.bf16.mxu0 0
  %1601 = vmatpush1.bf16.msra.mxu0 0
  %1602 = vmatprep.subr.bf16.mxu0 0
  %1603 = vmatpush1.bf16.msra.mxu0 0
  %1604 = vmatprep.subr.bf16.mxu0 0
  %1605 = vmatpush1.bf16.msra.mxu0 0
  %1606 = vmatprep.subr.bf16.mxu0 0
  %1607 = vmatpush1.bf16.msra.mxu0 0
  %1608 = vmatprep.subr.bf16.mxu0 0
  %1609 = vmatpush1.bf16.msra.mxu0 0
  %1610 = vmatprep.subr.bf16.mxu0 0
  %1611 = vmatpush1.bf16.msra.mxu0 0
  %1612 = vmatprep.subr.bf16.mxu0 0
  %1613 = vmatpush1.bf16.msra.mxu0 0
  %1614 = vmatprep.subr.bf16.mxu0 0
  %1615 = vmatpush1.bf16.msra.mxu0 0
  %1616 = vmatprep.subr.bf16.mxu0 0
  %1617 = vmatpush1.bf16.msra.mxu0 0
  %1618 = vmatprep.subr.bf16.mxu0 0
  %1619 = vmatpush1.bf16.msra.mxu0 0
  %1620 = vmatprep.subr.bf16.mxu0 0
  %1621 = vmatpush1.bf16.msra.mxu0 0
  %1622 = vmatprep.mubr.bf16.mxu0 0
  %1623 = vmatmul.mubr.bf16.gmra.mrb[0].mxu0 %v1588
  %v1624 = vpop.f32.mrb[0].mxu0
  %v1625 = vadd.f32 0.0, %v1624
  %v1626 = vpop.f32.mrb[0].mxu0
  %v1627 = vpop.f32.mrb[0].mxu0
  %v1628 = vpop.f32.mrb[0].mxu0
  %1629 = vdwg.mxu0
  %v1630 = vadd.f32 %v1140, %v1625
  %v1631 = vxor.u32 %v1630, 2147483648
  %v1632 = vmul.f32 %v1631, 1.442695
  %v1633 = vpow.pop %v1632
  %v1634 = vadd.f32 %v1633, 1.0
  %v1635 = vrcp.pop %v1634
  %v1636 = vmul.f32 1.0, %v1635
  %v1637 = vtanh.pop %v1630
  %v1638 = vmul.f32 %v1636, %v1576
  %1640 = vrot.lane.b32.xlu0 %v1637, 64
  %v1641 = vpop.permute.xlu0 %1640
  %v1643 = vmul.f32 %v1636, %v1641
  %1645 = vrot.lane.b32.xlu0 %v1643, 32
  %v1646 = vpop.permute.xlu0 %1645
  %v1648 = vadd.f32 %v1638, %v1646
  %v1649 = vtanh.pop %v1648
  %1651 = vrot.lane.b32.xlu0 %v1649, 64
  %v1652 = vpop.permute.xlu0 %1651
  %v1654 = vmul.f32 %v1636, %v1652
  %v1655 = vpack.c.bf16 %v1654, %v1654
  %1657 = vrot.lane.b32.xlu0 %v1655, 32
  %v1658 = vpop.permute.xlu0 %1657
  %v1660 = vsel %vm428, %v1658, 0
  %1662 = vmatprep.subr.bf16.mxu0 0
  %1663 = vmatpush1.bf16.msra.mxu0 %v1154
  %1664 = vmatprep.subr.bf16.mxu0 0
  %1665 = vmatpush1.bf16.msra.mxu0 %v1155
  %1666 = vmatprep.subr.bf16.mxu0 0
  %1667 = vmatpush1.bf16.msra.mxu0 0
  %1668 = vmatprep.subr.bf16.mxu0 0
  %1669 = vmatpush1.bf16.msra.mxu0 0
  %1670 = vmatprep.subr.bf16.mxu0 0
  %1671 = vmatpush1.bf16.msra.mxu0 0
  %1672 = vmatprep.subr.bf16.mxu0 0
  %1673 = vmatpush1.bf16.msra.mxu0 0
  %1674 = vmatprep.subr.bf16.mxu0 0
  %1675 = vmatpush1.bf16.msra.mxu0 0
  %1676 = vmatprep.subr.bf16.mxu0 0
  %1677 = vmatpush1.bf16.msra.mxu0 0
  %1678 = vmatprep.subr.bf16.mxu0 0
  %1679 = vmatpush1.bf16.msra.mxu0 0
  %1680 = vmatprep.subr.bf16.mxu0 0
  %1681 = vmatpush1.bf16.msra.mxu0 0
  %1682 = vmatprep.subr.bf16.mxu0 0
  %1683 = vmatpush1.bf16.msra.mxu0 0
  %1684 = vmatprep.subr.bf16.mxu0 0
  %1685 = vmatpush1.bf16.msra.mxu0 0
  %1686 = vmatprep.subr.bf16.mxu0 0
  %1687 = vmatpush1.bf16.msra.mxu0 0
  %1688 = vmatprep.subr.bf16.mxu0 0
  %1689 = vmatpush1.bf16.msra.mxu0 0
  %1690 = vmatprep.subr.bf16.mxu0 0
  %1691 = vmatpush1.bf16.msra.mxu0 0
  %1692 = vmatprep.subr.bf16.mxu0 0
  %1693 = vmatpush1.bf16.msra.mxu0 0
  %1694 = vmatprep.mubr.bf16.mxu0 0
  %1695 = vmatmul.mubr.bf16.gmra.mrb[0].mxu0 %v1660
  %v1696 = vpop.f32.mrb[0].mxu0
  %v1697 = vadd.f32 0.0, %v1696
  %v1698 = vpop.f32.mrb[0].mxu0
  %v1699 = vpop.f32.mrb[0].mxu0
  %v1700 = vpop.f32.mrb[0].mxu0
  %1701 = vdwg.mxu0
  %v1702 = vadd.f32 %v1143, %v1697
  %v1703 = vxor.u32 %v1702, 2147483648
  %v1704 = vmul.f32 %v1703, 1.442695
  %v1705 = vpow.pop %v1704
  %v1706 = vadd.f32 %v1705, 1.0
  %v1707 = vrcp.pop %v1706
  %v1708 = vmul.f32 1.0, %v1707
  %v1709 = vtanh.pop %v1702
  %v1710 = vmul.f32 %v1708, %v1648
  %1712 = vrot.lane.b32.xlu0 %v1709, 64
  %v1713 = vpop.permute.xlu0 %1712
  %v1715 = vmul.f32 %v1708, %v1713
  %1717 = vrot.lane.b32.xlu0 %v1715, 32
  %v1718 = vpop.permute.xlu0 %1717
  %v1720 = vadd.f32 %v1710, %v1718
  %v1721 = vtanh.pop %v1720
  %1723 = vrot.lane.b32.xlu0 %v1721, 64
  %v1724 = vpop.permute.xlu0 %1723
  %v1726 = vmul.f32 %v1708, %v1724
  %v1727 = vpack.c.bf16 %v1726, %v1726
  %v1728 = vld [vmem:[%s3] sm:$0xf]
  %v1729 = vld [vmem:[%s3 + $0x4] sm:$0xf]
  %v1730 = vld [vmem:[%s3 + $0x8] sm:$0xf]
  %v1731 = vld [vmem:[%s3 + $0xc] sm:$0xf]
  %v1732 = vlaneseq
  %v1733 = vshrl.u32 %v1732, 7
  %v1734 = vsub.s32 0, %v1733
  %v1735 = vrot.slane %v24, %v1734
  %1737 = vrot.lane.b32.xlu0 %v1727, 32
  %v1738 = vpop.permute.xlu0 %1737
  %v1743 = vunpack.c.l.b16 %v1728
  %v1744 = vunpack.c.l.b16 %v1729
  %v1745 = vunpack.c.l.b16 %v1730
  %v1746 = vunpack.c.l.b16 %v1731
  %v1747 = vpack.c.b16 %v1744, %v1743
  %v1748 = vpack.c.b16 %v1746, %v1745
  %v1752 = vsel %vm428, %v1738, 0
  %1754 = vmatprep.subr.bf16.mxu0 0
  %1755 = vmatpush1.bf16.msra.mxu0 %v1747
  %1756 = vmatprep.subr.bf16.mxu0 0
  %1757 = vmatpush1.bf16.msra.mxu0 %v1748
  %1758 = vmatprep.subr.bf16.mxu0 0
  %1759 = vmatpush1.bf16.msra.mxu0 0
  %1760 = vmatprep.subr.bf16.mxu0 0
  %1761 = vmatpush1.bf16.msra.mxu0 0
  %1762 = vmatprep.subr.bf16.mxu0 0
  %1763 = vmatpush1.bf16.msra.mxu0 0
  %1764 = vmatprep.subr.bf16.mxu0 0
  %1765 = vmatpush1.bf16.msra.mxu0 0
  %1766 = vmatprep.subr.bf16.mxu0 0
  %1767 = vmatpush1.bf16.msra.mxu0 0
  %1768 = vmatprep.subr.bf16.mxu0 0
  %1769 = vmatpush1.bf16.msra.mxu0 0
  %1770 = vmatprep.subr.bf16.mxu0 0
  %1771 = vmatpush1.bf16.msra.mxu0 0
  %1772 = vmatprep.subr.bf16.mxu0 0
  %1773 = vmatpush1.bf16.msra.mxu0 0
  %1774 = vmatprep.subr.bf16.mxu0 0
  %1775 = vmatpush1.bf16.msra.mxu0 0
  %1776 = vmatprep.subr.bf16.mxu0 0
  %1777 = vmatpush1.bf16.msra.mxu0 0
  %1778 = vmatprep.subr.bf16.mxu0 0
  %1779 = vmatpush1.bf16.msra.mxu0 0
  %1780 = vmatprep.subr.bf16.mxu0 0
  %1781 = vmatpush1.bf16.msra.mxu0 0
  %1782 = vmatprep.subr.bf16.mxu0 0
  %1783 = vmatpush1.bf16.msra.mxu0 0
  %1784 = vmatprep.subr.bf16.mxu0 0
  %1785 = vmatpush1.bf16.msra.mxu0 0
  %1786 = vmatprep.mubr.bf16.mxu0 0
  %1787 = vmatmul.mubr.bf16.gmra.mrb[0].mxu0 %v1752
  %v1788 = vpop.f32.mrb[0].mxu0
  %v1789 = vadd.f32 %v1735, %v1788
  %v1790 = vpop.f32.mrb[0].mxu0
  %v1791 = vpop.f32.mrb[0].mxu0
  %v1792 = vpop.f32.mrb[0].mxu0
  %1793 = vdwg.mxu0
  %vm1794 = vcmask 39936
  %1795 = vst.msk [vmem:[%s5] sm:$0xff] %vm1794, %v1789
  // Predicated region
  $region22: #{cnn_lstm_forward.1} parent=0 // pred_check
    _
  $region23: #{cnn_lstm_forward.1} parent=0 // pred_check_branch
    %1797 = sbr.rel (0) target = $region25
  $region24: #{cnn_lstm_forward.1} parent=0 // pred_region
    _
  $region25: #{cnn_lstm_forward.1} parent=0 // pred_fallthru
    _
  // Predicated region
  $region26: #{cnn_lstm_forward.1} parent=0 // pred_check
    _
  $region27: #{cnn_lstm_forward.1} parent=0 // pred_check_branch
    %1799 = sbr.rel (0) target = $region29
  $region28: #{cnn_lstm_forward.1} parent=0 // pred_region
    _
  $region29: #{cnn_lstm_forward.1} parent=0 // pred_fallthru
    _

</llo_original>
